<compile_context>
chip_gen: v7x
topology: tpu7x:2x2x1
jax: 0.10.0
libtpu: 0.0.40
codegen_flags: <defaults>
</compile_context>

<pallas_src>
import jax
import jax.numpy as jnp
from jax.experimental import pallas as pl
from jax.experimental.pallas import tpu as pltpu


# ----------------------------- configuration ------------------------------
DIMX = 32          # input node-feature dim
DIMY = 8           # output (stalk) dim
NSMAT = 64         # hidden width of fc_smat
NUM_HIDDEN = 6     # the six middle (nsmat -> nsmat) linear layers
OUT_PAD = 128      # lane-dense output width (q lives in lanes 0..DIMY-1)
N = 256            # number of nodes for the demo/test


def _pick_tm(n):
    # Largest row tile in {1024, 512, 256, 128} that still leaves >= 2 grid
    # steps (so dimension_semantics=("parallel",) can use both v7x TCs);
    # for tiny inputs fall back to 128 (single step).
    for tm in (1024, 512, 256, 128):
        if n >= 2 * tm:
            return tm
    return 128


def _selection_matrix():
    # S[k, y] = 1 iff k // DIMX == y (y < DIMY); zero-padded to 128 lanes so
    # the final MXU matmul directly produces a lane-dense (TM, 128) result.
    k = jnp.arange(DIMY * DIMX)
    y = jnp.arange(OUT_PAD)
    return ((k[:, None] // DIMX) == y[None, :]).astype(jnp.bfloat16)


# ------------------------------ Pallas kernel ------------------------------
def sheaf_kernel(x_ref, w_in_ref, b_in_ref, w_hid_ref, b_hid_ref,
                 w_out_ref, b_out_ref, sel_ref, o_ref):
    # x tile: (TM, DIMX) f32
    x = x_ref[...]
    x_bf = x.astype(jnp.bfloat16)

    # Linear(dimx, nsmat) + ReLU  (bf16 operands, f32 accumulate)
    h = jnp.dot(x_bf, w_in_ref[...], preferred_element_type=jnp.float32)
    h = jnp.maximum(h + b_in_ref[...], 0.0)

    # 6 x [Linear(nsmat, nsmat) + ReLU]
    for l in range(NUM_HIDDEN):
        h = jnp.dot(h.astype(jnp.bfloat16), w_hid_ref[l],
                    preferred_element_type=jnp.float32)
        h = jnp.maximum(h + b_hid_ref[l], 0.0)

    # Final Linear(nsmat, dimy*dimx), no ReLU
    smat_flat = jnp.dot(h.astype(jnp.bfloat16), w_out_ref[...],
                        preferred_element_type=jnp.float32)
    smat_flat = smat_flat + b_out_ref[...]                 # (TM, DIMY*DIMX) f32

    # Batched mat-vec: q[n, y] = sum_x smat[n, y*DIMX + x_] * x[n, x_]
    # VPU multiply against a lane-tiled copy of x, then one K=256 MXU matmul
    # with a constant 0/1 selection matrix -> lane-dense (TM, 128) result.
    x_tiled = jnp.concatenate([x] * DIMY, axis=-1)         # (TM, DIMY*DIMX) f32
    prod = smat_flat * x_tiled                             # f32 on VPU
    q_pad = jnp.dot(prod.astype(jnp.bfloat16), sel_ref[...],
                    preferred_element_type=jnp.float32)    # (TM, OUT_PAD)
    o_ref[...] = q_pad


# ------------------------------ host wrapper -------------------------------
@jax.jit
def fast_esheaf_forward(x, w_in, b_in, w_hid, b_hid, w_out, b_out):
    n, dimx = x.shape
    assert dimx == DIMX

    tm = _pick_tm(n)
    n_pad = ((n + tm - 1) // tm) * tm
    x_p = x if n_pad == n else jnp.pad(x, ((0, n_pad - n), (0, 0)))

    # bf16 matmul operands (halves weight DMA); biases stay f32.
    w_in_b = w_in.astype(jnp.bfloat16)
    w_hid_b = w_hid.astype(jnp.bfloat16)
    w_out_b = w_out.astype(jnp.bfloat16)
    sel = _selection_matrix()

    grid = (n_pad // tm,)

    # Advisory cost estimate for XLA scheduling around this small custom call.
    flops = n_pad * (2 * (DIMX * NSMAT
                          + NUM_HIDDEN * NSMAT * NSMAT
                          + NSMAT * DIMY * DIMX
                          + DIMY * DIMX * OUT_PAD)
                     + DIMY * DIMX)
    bytes_accessed = (n_pad * DIMX * 4                      # x (f32)
                      + w_in_b.size * 2 + w_hid_b.size * 2 + w_out_b.size * 2
                      + b_in.size * 4 + b_hid.size * 4 + b_out.size * 4
                      + sel.size * 2
                      + n_pad * OUT_PAD * 4)                # output slab

    full = lambda shape: pl.BlockSpec(shape, lambda i, _s=shape: (0,) * len(_s))

    out = pl.pallas_call(
        sheaf_kernel,
        out_shape=jax.ShapeDtypeStruct((n_pad, OUT_PAD), jnp.float32),
        grid=grid,
        in_specs=[
            pl.BlockSpec((tm, DIMX), lambda i: (i, 0)),     # x row tile
            full((DIMX, NSMAT)),                            # w_in   (bf16)
            full((1, NSMAT)),                               # b_in   (f32)
            full((NUM_HIDDEN, NSMAT, NSMAT)),               # w_hid  (bf16)
            full((NUM_HIDDEN, 1, NSMAT)),                   # b_hid  (f32)
            full((NSMAT, DIMY * DIMX)),                     # w_out  (bf16)
            full((1, DIMY * DIMX)),                         # b_out  (f32)
            full((DIMY * DIMX, OUT_PAD)),                   # selection (bf16)
        ],
        out_specs=pl.BlockSpec((tm, OUT_PAD), lambda i: (i, 0)),
        compiler_params=pltpu.CompilerParams(
            dimension_semantics=("parallel",)),
        cost_estimate=pl.CostEstimate(flops=int(flops), transcendentals=0,
                                      bytes_accessed=int(bytes_accessed)),
    )(x_p, w_in_b, b_in, w_hid_b, b_hid, w_out_b, b_out, sel)

    return out[:n, :DIMY]


# --------------------------- pure-JAX reference ----------------------------
def reference_forward(x, w_in, b_in, w_hid, b_hid, w_out, b_out):
    # Matches the kernel's precision choices: bf16 matmul operands with f32
    # accumulation; bias/ReLU/elementwise in f32.
    bf = jnp.bfloat16
    h = jnp.dot(x.astype(bf), w_in.astype(bf),
                preferred_element_type=jnp.float32)
    h = jax.nn.relu(h + b_in)
    for l in range(NUM_HIDDEN):
        h = jnp.dot(h.astype(bf), w_hid[l].astype(bf),
                    preferred_element_type=jnp.float32)
        h = jax.nn.relu(h + b_hid[l])
    smat_flat = jnp.dot(h.astype(bf), w_out.astype(bf),
                        preferred_element_type=jnp.float32) + b_out
    smat = smat_flat.reshape(-1, DIMY, DIMX)
    prod = (smat * x[:, None, :]).astype(bf).astype(jnp.float32)
    return prod.sum(-1)


# ---------------------------------- main -----------------------------------
if __name__ == "__main__":
    key = jax.random.PRNGKey(0)
    ks = jax.random.split(key, 8)

    scale = 0.1
    x = jax.random.normal(ks[0], (N, DIMX), dtype=jnp.float32)
    w_in = scale * jax.random.normal(ks[1], (DIMX, NSMAT), dtype=jnp.float32)
    b_in = scale * jax.random.normal(ks[2], (1, NSMAT), dtype=jnp.float32)
    w_hid = scale * jax.random.normal(ks[3], (NUM_HIDDEN, NSMAT, NSMAT),
                                      dtype=jnp.float32)
    b_hid = scale * jax.random.normal(ks[4], (NUM_HIDDEN, 1, NSMAT),
                                      dtype=jnp.float32)
    w_out = scale * jax.random.normal(ks[5], (NSMAT, DIMY * DIMX),
                                      dtype=jnp.float32)
    b_out = scale * jax.random.normal(ks[6], (1, DIMY * DIMX),
                                      dtype=jnp.float32)

    # Full-multiple case (N = 256 -> grid of 2 row tiles).
    q = fast_esheaf_forward(x, w_in, b_in, w_hid, b_hid, w_out, b_out)
    q = jax.block_until_ready(q)
    q_ref = reference_forward(x, w_in, b_in, w_hid, b_hid, w_out, b_out)
    assert q.shape == (N, DIMY)
    assert jnp.allclose(q, q_ref, atol=1e-2, rtol=1e-2), "mismatch vs reference"

    # Ragged-N case (exercises zero-padding of the last row tile).
    n2 = 200
    q2 = fast_esheaf_forward(x[:n2], w_in, b_in, w_hid, b_hid, w_out, b_out)
    q2 = jax.block_until_ready(q2)
    assert q2.shape == (n2, DIMY)
    assert jnp.allclose(q2, q_ref[:n2], atol=1e-2, rtol=1e-2), "ragged mismatch"

    print("KERNEL_OK")
</pallas_src>

<mosaic_0001>
module attributes {stable_mosaic.version = 11 : i64} {
  func.func @sheaf_kernel(%arg0: i32, %arg1: memref<128x32xf32, #tpu.memory_space<vmem>>, %arg2: memref<32x64xbf16, #tpu.memory_space<vmem>>, %arg3: memref<1x64xf32, #tpu.memory_space<vmem>>, %arg4: memref<6x64x64xbf16, #tpu.memory_space<vmem>>, %arg5: memref<6x1x64xf32, #tpu.memory_space<vmem>>, %arg6: memref<64x256xbf16, #tpu.memory_space<vmem>>, %arg7: memref<1x256xf32, #tpu.memory_space<vmem>>, %arg8: memref<256x128xbf16, #tpu.memory_space<vmem>>, %arg9: memref<128x128xf32, #tpu.memory_space<vmem>>) attributes {dimension_semantics = [#tpu.dimension_semantics<parallel>], iteration_bounds = array<i64: 2>, scalar_prefetch = 0 : i64, scratch_operands = 0 : i64, tpu.core_type = #tpu.core_type<tc>, window_params = [{transform_indices = @transform_0, window_bounds = array<i64: 128, 32>}, {pipeline_mode = #tpu.pipeline_mode<synchronous>, transform_indices = @transform_1, window_bounds = array<i64: 32, 64>}, {pipeline_mode = #tpu.pipeline_mode<synchronous>, transform_indices = @transform_2, window_bounds = array<i64: 1, 64>}, {pipeline_mode = #tpu.pipeline_mode<synchronous>, transform_indices = @transform_3, window_bounds = array<i64: 6, 64, 64>}, {pipeline_mode = #tpu.pipeline_mode<synchronous>, transform_indices = @transform_4, window_bounds = array<i64: 6, 1, 64>}, {pipeline_mode = #tpu.pipeline_mode<synchronous>, transform_indices = @transform_5, window_bounds = array<i64: 64, 256>}, {pipeline_mode = #tpu.pipeline_mode<synchronous>, transform_indices = @transform_6, window_bounds = array<i64: 1, 256>}, {pipeline_mode = #tpu.pipeline_mode<synchronous>, transform_indices = @transform_7, window_bounds = array<i64: 256, 128>}, {transform_indices = @transform_8, window_bounds = array<i64: 128, 128>}]} {
    %c0 = arith.constant 0 : index
    %c0_0 = arith.constant 0 : index
    %0 = vector.load %arg1[%c0, %c0_0] : memref<128x32xf32, #tpu.memory_space<vmem>>, vector<128x32xf32>
    %1 = arith.truncf %0 : vector<128x32xf32> to vector<128x32xbf16>
    %c0_1 = arith.constant 0 : index
    %c0_2 = arith.constant 0 : index
    %2 = vector.load %arg2[%c0_1, %c0_2] : memref<32x64xbf16, #tpu.memory_space<vmem>>, vector<32x64xbf16>
    %cst = arith.constant dense<0.000000e+00> : vector<128x64xf32>
    %3 = tpu.matmul %1, %2, %cst {dimension_numbers = #tpu.dot_dimension_numbers<[1], [0], [0], [1], [0, 0, 1, 1], [], []>} : vector<128x32xbf16>, vector<32x64xbf16>, vector<128x64xf32> -> vector<128x64xf32>
    %c0_3 = arith.constant 0 : index
    %c0_4 = arith.constant 0 : index
    %4 = vector.load %arg3[%c0_3, %c0_4] : memref<1x64xf32, #tpu.memory_space<vmem>>, vector<1x64xf32>
    %5 = vector.broadcast %4 : vector<1x64xf32> to vector<128x64xf32>
    %6 = arith.addf %3, %5 : vector<128x64xf32>
    %cst_5 = arith.constant 0.000000e+00 : f32
    %7 = vector.broadcast %cst_5 : f32 to vector<128x64xf32>
    %8 = arith.maximumf %6, %7 : vector<128x64xf32>
    %9 = arith.truncf %8 : vector<128x64xf32> to vector<128x64xbf16>
    %c0_6 = arith.constant 0 : index
    %c0_7 = arith.constant 0 : index
    %c0_8 = arith.constant 0 : index
    %10 = vector.load %arg4[%c0_6, %c0_7, %c0_8] : memref<6x64x64xbf16, #tpu.memory_space<vmem>>, vector<1x64x64xbf16>
    %11 = vector.shape_cast %10 : vector<1x64x64xbf16> to vector<64x64xbf16>
    %cst_9 = arith.constant dense<0.000000e+00> : vector<128x64xf32>
    %12 = tpu.matmul %9, %11, %cst_9 {dimension_numbers = #tpu.dot_dimension_numbers<[1], [0], [0], [1], [0, 0, 1, 1], [], []>} : vector<128x64xbf16>, vector<64x64xbf16>, vector<128x64xf32> -> vector<128x64xf32>
    %c0_10 = arith.constant 0 : index
    %c0_11 = arith.constant 0 : index
    %c0_12 = arith.constant 0 : index
    %13 = vector.load %arg5[%c0_10, %c0_11, %c0_12] : memref<6x1x64xf32, #tpu.memory_space<vmem>>, vector<1x1x64xf32>
    %14 = vector.shape_cast %13 : vector<1x1x64xf32> to vector<1x64xf32>
    %15 = vector.broadcast %14 : vector<1x64xf32> to vector<128x64xf32>
    %16 = arith.addf %12, %15 : vector<128x64xf32>
    %cst_13 = arith.constant 0.000000e+00 : f32
    %17 = vector.broadcast %cst_13 : f32 to vector<128x64xf32>
    %18 = arith.maximumf %16, %17 : vector<128x64xf32>
    %19 = arith.truncf %18 : vector<128x64xf32> to vector<128x64xbf16>
    %c1 = arith.constant 1 : index
    %c0_14 = arith.constant 0 : index
    %c0_15 = arith.constant 0 : index
    %20 = vector.load %arg4[%c1, %c0_14, %c0_15] : memref<6x64x64xbf16, #tpu.memory_space<vmem>>, vector<1x64x64xbf16>
    %21 = vector.shape_cast %20 : vector<1x64x64xbf16> to vector<64x64xbf16>
    %cst_16 = arith.constant dense<0.000000e+00> : vector<128x64xf32>
    %22 = tpu.matmul %19, %21, %cst_16 {dimension_numbers = #tpu.dot_dimension_numbers<[1], [0], [0], [1], [0, 0, 1, 1], [], []>} : vector<128x64xbf16>, vector<64x64xbf16>, vector<128x64xf32> -> vector<128x64xf32>
    %c1_17 = arith.constant 1 : index
    %c0_18 = arith.constant 0 : index
    %c0_19 = arith.constant 0 : index
    %23 = vector.load %arg5[%c1_17, %c0_18, %c0_19] : memref<6x1x64xf32, #tpu.memory_space<vmem>>, vector<1x1x64xf32>
    %24 = vector.shape_cast %23 : vector<1x1x64xf32> to vector<1x64xf32>
    %25 = vector.broadcast %24 : vector<1x64xf32> to vector<128x64xf32>
    %26 = arith.addf %22, %25 : vector<128x64xf32>
    %cst_20 = arith.constant 0.000000e+00 : f32
    %27 = vector.broadcast %cst_20 : f32 to vector<128x64xf32>
    %28 = arith.maximumf %26, %27 : vector<128x64xf32>
    %29 = arith.truncf %28 : vector<128x64xf32> to vector<128x64xbf16>
    %c2 = arith.constant 2 : index
    %c0_21 = arith.constant 0 : index
    %c0_22 = arith.constant 0 : index
    %30 = vector.load %arg4[%c2, %c0_21, %c0_22] : memref<6x64x64xbf16, #tpu.memory_space<vmem>>, vector<1x64x64xbf16>
    %31 = vector.shape_cast %30 : vector<1x64x64xbf16> to vector<64x64xbf16>
    %cst_23 = arith.constant dense<0.000000e+00> : vector<128x64xf32>
    %32 = tpu.matmul %29, %31, %cst_23 {dimension_numbers = #tpu.dot_dimension_numbers<[1], [0], [0], [1], [0, 0, 1, 1], [], []>} : vector<128x64xbf16>, vector<64x64xbf16>, vector<128x64xf32> -> vector<128x64xf32>
    %c2_24 = arith.constant 2 : index
    %c0_25 = arith.constant 0 : index
    %c0_26 = arith.constant 0 : index
    %33 = vector.load %arg5[%c2_24, %c0_25, %c0_26] : memref<6x1x64xf32, #tpu.memory_space<vmem>>, vector<1x1x64xf32>
    %34 = vector.shape_cast %33 : vector<1x1x64xf32> to vector<1x64xf32>
    %35 = vector.broadcast %34 : vector<1x64xf32> to vector<128x64xf32>
    %36 = arith.addf %32, %35 : vector<128x64xf32>
    %cst_27 = arith.constant 0.000000e+00 : f32
    %37 = vector.broadcast %cst_27 : f32 to vector<128x64xf32>
    %38 = arith.maximumf %36, %37 : vector<128x64xf32>
    %39 = arith.truncf %38 : vector<128x64xf32> to vector<128x64xbf16>
    %c3 = arith.constant 3 : index
    %c0_28 = arith.constant 0 : index
    %c0_29 = arith.constant 0 : index
    %40 = vector.load %arg4[%c3, %c0_28, %c0_29] : memref<6x64x64xbf16, #tpu.memory_space<vmem>>, vector<1x64x64xbf16>
    %41 = vector.shape_cast %40 : vector<1x64x64xbf16> to vector<64x64xbf16>
    %cst_30 = arith.constant dense<0.000000e+00> : vector<128x64xf32>
    %42 = tpu.matmul %39, %41, %cst_30 {dimension_numbers = #tpu.dot_dimension_numbers<[1], [0], [0], [1], [0, 0, 1, 1], [], []>} : vector<128x64xbf16>, vector<64x64xbf16>, vector<128x64xf32> -> vector<128x64xf32>
    %c3_31 = arith.constant 3 : index
    %c0_32 = arith.constant 0 : index
    %c0_33 = arith.constant 0 : index
    %43 = vector.load %arg5[%c3_31, %c0_32, %c0_33] : memref<6x1x64xf32, #tpu.memory_space<vmem>>, vector<1x1x64xf32>
    %44 = vector.shape_cast %43 : vector<1x1x64xf32> to vector<1x64xf32>
    %45 = vector.broadcast %44 : vector<1x64xf32> to vector<128x64xf32>
    %46 = arith.addf %42, %45 : vector<128x64xf32>
    %cst_34 = arith.constant 0.000000e+00 : f32
    %47 = vector.broadcast %cst_34 : f32 to vector<128x64xf32>
    %48 = arith.maximumf %46, %47 : vector<128x64xf32>
    %49 = arith.truncf %48 : vector<128x64xf32> to vector<128x64xbf16>
    %c4 = arith.constant 4 : index
    %c0_35 = arith.constant 0 : index
    %c0_36 = arith.constant 0 : index
    %50 = vector.load %arg4[%c4, %c0_35, %c0_36] : memref<6x64x64xbf16, #tpu.memory_space<vmem>>, vector<1x64x64xbf16>
    %51 = vector.shape_cast %50 : vector<1x64x64xbf16> to vector<64x64xbf16>
    %cst_37 = arith.constant dense<0.000000e+00> : vector<128x64xf32>
    %52 = tpu.matmul %49, %51, %cst_37 {dimension_numbers = #tpu.dot_dimension_numbers<[1], [0], [0], [1], [0, 0, 1, 1], [], []>} : vector<128x64xbf16>, vector<64x64xbf16>, vector<128x64xf32> -> vector<128x64xf32>
    %c4_38 = arith.constant 4 : index
    %c0_39 = arith.constant 0 : index
    %c0_40 = arith.constant 0 : index
    %53 = vector.load %arg5[%c4_38, %c0_39, %c0_40] : memref<6x1x64xf32, #tpu.memory_space<vmem>>, vector<1x1x64xf32>
    %54 = vector.shape_cast %53 : vector<1x1x64xf32> to vector<1x64xf32>
    %55 = vector.broadcast %54 : vector<1x64xf32> to vector<128x64xf32>
    %56 = arith.addf %52, %55 : vector<128x64xf32>
    %cst_41 = arith.constant 0.000000e+00 : f32
    %57 = vector.broadcast %cst_41 : f32 to vector<128x64xf32>
    %58 = arith.maximumf %56, %57 : vector<128x64xf32>
    %59 = arith.truncf %58 : vector<128x64xf32> to vector<128x64xbf16>
    %c5 = arith.constant 5 : index
    %c0_42 = arith.constant 0 : index
    %c0_43 = arith.constant 0 : index
    %60 = vector.load %arg4[%c5, %c0_42, %c0_43] : memref<6x64x64xbf16, #tpu.memory_space<vmem>>, vector<1x64x64xbf16>
    %61 = vector.shape_cast %60 : vector<1x64x64xbf16> to vector<64x64xbf16>
    %cst_44 = arith.constant dense<0.000000e+00> : vector<128x64xf32>
    %62 = tpu.matmul %59, %61, %cst_44 {dimension_numbers = #tpu.dot_dimension_numbers<[1], [0], [0], [1], [0, 0, 1, 1], [], []>} : vector<128x64xbf16>, vector<64x64xbf16>, vector<128x64xf32> -> vector<128x64xf32>
    %c5_45 = arith.constant 5 : index
    %c0_46 = arith.constant 0 : index
    %c0_47 = arith.constant 0 : index
    %63 = vector.load %arg5[%c5_45, %c0_46, %c0_47] : memref<6x1x64xf32, #tpu.memory_space<vmem>>, vector<1x1x64xf32>
    %64 = vector.shape_cast %63 : vector<1x1x64xf32> to vector<1x64xf32>
    %65 = vector.broadcast %64 : vector<1x64xf32> to vector<128x64xf32>
    %66 = arith.addf %62, %65 : vector<128x64xf32>
    %cst_48 = arith.constant 0.000000e+00 : f32
    %67 = vector.broadcast %cst_48 : f32 to vector<128x64xf32>
    %68 = arith.maximumf %66, %67 : vector<128x64xf32>
    %69 = arith.truncf %68 : vector<128x64xf32> to vector<128x64xbf16>
    %c0_49 = arith.constant 0 : index
    %c0_50 = arith.constant 0 : index
    %70 = vector.load %arg6[%c0_49, %c0_50] : memref<64x256xbf16, #tpu.memory_space<vmem>>, vector<64x256xbf16>
    %cst_51 = arith.constant dense<0.000000e+00> : vector<128x256xf32>
    %71 = tpu.matmul %69, %70, %cst_51 {dimension_numbers = #tpu.dot_dimension_numbers<[1], [0], [0], [1], [0, 0, 1, 1], [], []>} : vector<128x64xbf16>, vector<64x256xbf16>, vector<128x256xf32> -> vector<128x256xf32>
    %c0_52 = arith.constant 0 : index
    %c0_53 = arith.constant 0 : index
    %72 = vector.load %arg7[%c0_52, %c0_53] : memref<1x256xf32, #tpu.memory_space<vmem>>, vector<1x256xf32>
    %73 = vector.broadcast %72 : vector<1x256xf32> to vector<128x256xf32>
    %74 = arith.addf %71, %73 : vector<128x256xf32>
    %75 = tpu.concatenate %0, %0, %0, %0, %0, %0, %0, %0 in 1 : vector<128x32xf32>, vector<128x32xf32>, vector<128x32xf32>, vector<128x32xf32>, vector<128x32xf32>, vector<128x32xf32>, vector<128x32xf32>, vector<128x32xf32> -> vector<128x256xf32>
    %76 = arith.mulf %74, %75 : vector<128x256xf32>
    %77 = arith.truncf %76 : vector<128x256xf32> to vector<128x256xbf16>
    %c0_54 = arith.constant 0 : index
    %c0_55 = arith.constant 0 : index
    %78 = vector.load %arg8[%c0_54, %c0_55] : memref<256x128xbf16, #tpu.memory_space<vmem>>, vector<256x128xbf16>
    %cst_56 = arith.constant dense<0.000000e+00> : vector<128x128xf32>
    %79 = tpu.matmul %77, %78, %cst_56 {dimension_numbers = #tpu.dot_dimension_numbers<[1], [0], [0], [1], [0, 0, 1, 1], [], []>} : vector<128x256xbf16>, vector<256x128xbf16>, vector<128x128xf32> -> vector<128x128xf32>
    %c0_57 = arith.constant 0 : index
    %c0_58 = arith.constant 0 : index
    %80 = vector.load %arg9[%c0_57, %c0_58] : memref<128x128xf32, #tpu.memory_space<vmem>>, vector<128x128xf32>
    tpu.vector_store %arg9[%c0_57, %c0_58], %79 {strides = array<i32>} : memref<128x128xf32, #tpu.memory_space<vmem>>, vector<128x128xf32>,
    return
  }
  func.func @transform_0(%arg0: i32) -> (i32, i32) {
    %c0_i32 = arith.constant 0 : i32
    %c0_i32_0 = arith.constant 0 : i32
    return %arg0, %c0_i32 : i32, i32
  }
  func.func @transform_1(%arg0: i32) -> (i32, i32) {
    %c0_i32 = arith.constant 0 : i32
    %c0_i32_0 = arith.constant 0 : i32
    %c0_i32_1 = arith.constant 0 : i32
    return %c0_i32, %c0_i32_0 : i32, i32
  }
  func.func @transform_2(%arg0: i32) -> (i32, i32) {
    %c0_i32 = arith.constant 0 : i32
    %c0_i32_0 = arith.constant 0 : i32
    %c0_i32_1 = arith.constant 0 : i32
    return %c0_i32, %c0_i32_0 : i32, i32
  }
  func.func @transform_3(%arg0: i32) -> (i32, i32, i32) {
    %c0_i32 = arith.constant 0 : i32
    %c0_i32_0 = arith.constant 0 : i32
    %c0_i32_1 = arith.constant 0 : i32
    %c0_i32_2 = arith.constant 0 : i32
    return %c0_i32, %c0_i32_0, %c0_i32_1 : i32, i32, i32
  }
  func.func @transform_4(%arg0: i32) -> (i32, i32, i32) {
    %c0_i32 = arith.constant 0 : i32
    %c0_i32_0 = arith.constant 0 : i32
    %c0_i32_1 = arith.constant 0 : i32
    %c0_i32_2 = arith.constant 0 : i32
    return %c0_i32, %c0_i32_0, %c0_i32_1 : i32, i32, i32
  }
  func.func @transform_5(%arg0: i32) -> (i32, i32) {
    %c0_i32 = arith.constant 0 : i32
    %c0_i32_0 = arith.constant 0 : i32
    %c0_i32_1 = arith.constant 0 : i32
    return %c0_i32, %c0_i32_0 : i32, i32
  }
  func.func @transform_6(%arg0: i32) -> (i32, i32) {
    %c0_i32 = arith.constant 0 : i32
    %c0_i32_0 = arith.constant 0 : i32
    %c0_i32_1 = arith.constant 0 : i32
    return %c0_i32, %c0_i32_0 : i32, i32
  }
  func.func @transform_7(%arg0: i32) -> (i32, i32) {
    %c0_i32 = arith.constant 0 : i32
    %c0_i32_0 = arith.constant 0 : i32
    %c0_i32_1 = arith.constant 0 : i32
    return %c0_i32, %c0_i32_0 : i32, i32
  }
  func.func @transform_8(%arg0: i32) -> (i32, i32) {
    %c0_i32 = arith.constant 0 : i32
    %c0_i32_0 = arith.constant 0 : i32
    return %arg0, %c0_i32 : i32, i32
  }
}

</mosaic_0001>

<llo_original>
// kernel: fast_esheaf_forward.1
$region0: #{fast_esheaf_forward.1}
  #allocation0 [shape = 'u32[]', space=smem, size = 0x4, offset = 0x4, fixed_abs, tag = 'smem constant byte address 0x4 - core index']
  #allocation1 [shape = 'u32[144,128]{1,0:T(1,128)}', space=vmem, size = 0x12000, scoped, tag = 'internal scratch']
  %s0 = inlined_call_operand.vmem [shape: f32[256,32], index: 0, kind: input, shape index: {}]
  %s1 = inlined_call_operand.vmem [shape: bf16[32,64], index: 1, kind: input, shape index: {}]
  %s2 = inlined_call_operand.vmem [shape: f32[1,64], index: 2, kind: input, shape index: {}]
  %s3 = inlined_call_operand.vmem [shape: bf16[6,64,64], index: 3, kind: input, shape index: {}]
  %s4 = inlined_call_operand.vmem [shape: f32[6,1,64], index: 4, kind: input, shape index: {}]
  %s5 = inlined_call_operand.vmem [shape: bf16[64,256], index: 5, kind: input, shape index: {}]
  %s6 = inlined_call_operand.vmem [shape: f32[1,256], index: 6, kind: input, shape index: {}]
  %s7 = inlined_call_operand.vmem [shape: bf16[256,128], index: 7, kind: input, shape index: {}]
  %s8 = inlined_call_operand.vmem [shape: f32[256,128], index: 8, kind: output, shape index: {}]
  %s9 = sld [smem:[#allocation0]]
  $region65: #{fast_esheaf_forward.1} parent=0
    _
  %s11 = ssub.s32 1, %s9
  %s12 = scalar_select 0, %s11, %s9
  loop: start=0, step=1, limit=4
  $region2: #{fast_esheaf_forward.1} parent=0 // loop_pre_header
    _
  $region3: #{fast_esheaf_forward.1} parent=0 // loop_header
    %s14 = sphi 0, %s18
    %p15 = scmp.ge.s32.totalorder %s14, 4
    %s24 = sphi 0, %s26
    %s27 = sphi 0, %s24
    %s28 = sphi 0, %s27
    %s44 = sphi 0, %s28
    %s48 = sphi 0, %s48
    %s50 = sphi 0, %s48
    %s51 = sphi 0, %s50
    %s65 = sphi 0, %s51
    %s69 = sphi 0, %s69
    %s71 = sphi 0, %s69
    %s72 = sphi 0, %s71
    %s86 = sphi 0, %s72
    %s90 = sphi 0, %s90
    %s92 = sphi 0, %s90
    %s93 = sphi 0, %s92
    %s107 = sphi 0, %s93
    %s111 = sphi 0, %s111
    %s113 = sphi 0, %s111
    %s114 = sphi 0, %s113
    %s128 = sphi 0, %s114
    %s132 = sphi 0, %s132
    %s134 = sphi 0, %s132
    %s135 = sphi 0, %s134
    %s149 = sphi 0, %s135
    %s153 = sphi 0, %s153
    %s155 = sphi 0, %s153
    %s156 = sphi 0, %s155
    %s170 = sphi 0, %s156
    %s174 = sphi 0, %s174
    %s176 = sphi 0, %s174
    %s177 = sphi 0, %s176
    %s191 = sphi 0, %s177
    %s197 = sphi 0, %s199
    %s200 = sphi 0, %s197
    %s201 = sphi 0, %s200
    %s217 = sphi 0, %s201
  $region4: #{fast_esheaf_forward.1} parent=0 // loop_header_branch
    %17 = sbr.rel (%p15) target = $region8
  $region5: #{fast_esheaf_forward.1} parent=0 // loop_body
    %s19 = ssub.s32 %s14, 1
    %s20 = ssub.s32 %s14, 2
    %s21 = sadd.s32 %s14, 1
    %s22 = ssub.s32 %s14, %s21
    %p23 = scmp.eq.s32.totalorder %s22, 0
    %s25 = sadd.s32 %s24, 1
    %s26 = scalar_select %p23, %s24, %s25
    %p29 = pneg %p23
    %p30 = scmp.eq.s32.totalorder %s14, 1
    %p31 = por %p29, %p30
    %p32 = scmp.ne.s32.totalorder %s24, %s27
    %p33 = scmp.eq.s32.totalorder %s14, 0
    %p34 = por %p32, %p33
    %p35 = scmp.ne.s32.totalorder %s24, %s27
    %p36 = scmp.eq.s32.totalorder %s19, 1
    %p37 = por %p35, %p36
    %p38 = scmp.ne.s32.totalorder %s27, %s28
    %p39 = scmp.eq.s32.totalorder %s19, 0
    %p40 = por %p38, %p39
    %p41 = scmp.ne.s32.totalorder %s27, %s28
    %p42 = scmp.eq.s32.totalorder %s20, 1
    %p43 = por %p41, %p42
    %p45 = scmp.ne.s32.totalorder %s28, %s44
    %p46 = scmp.eq.s32.totalorder %s20, 0
    %p47 = por %p45, %p46
    %s49 = sadd.s32 %s48, 1
    %p52 = scmp.eq.s32.totalorder %s14, 1
    %p53 = scmp.ne.s32.totalorder %s48, %s50
    %p54 = scmp.eq.s32.totalorder %s14, 0
    %p55 = por %p53, %p54
    %p56 = scmp.ne.s32.totalorder %s48, %s50
    %p57 = scmp.eq.s32.totalorder %s19, 1
    %p58 = por %p56, %p57
    %p59 = scmp.ne.s32.totalorder %s50, %s51
    %p60 = scmp.eq.s32.totalorder %s19, 0
    %p61 = por %p59, %p60
    %p62 = scmp.ne.s32.totalorder %s50, %s51
    %p63 = scmp.eq.s32.totalorder %s20, 1
    %p64 = por %p62, %p63
    %p66 = scmp.ne.s32.totalorder %s51, %s65
    %p67 = scmp.eq.s32.totalorder %s20, 0
    %p68 = por %p66, %p67
    %s70 = sadd.s32 %s69, 1
    %p73 = scmp.eq.s32.totalorder %s14, 1
    %p74 = scmp.ne.s32.totalorder %s69, %s71
    %p75 = scmp.eq.s32.totalorder %s14, 0
    %p76 = por %p74, %p75
    %p77 = scmp.ne.s32.totalorder %s69, %s71
    %p78 = scmp.eq.s32.totalorder %s19, 1
    %p79 = por %p77, %p78
    %p80 = scmp.ne.s32.totalorder %s71, %s72
    %p81 = scmp.eq.s32.totalorder %s19, 0
    %p82 = por %p80, %p81
    %p83 = scmp.ne.s32.totalorder %s71, %s72
    %p84 = scmp.eq.s32.totalorder %s20, 1
    %p85 = por %p83, %p84
    %p87 = scmp.ne.s32.totalorder %s72, %s86
    %p88 = scmp.eq.s32.totalorder %s20, 0
    %p89 = por %p87, %p88
    %s91 = sadd.s32 %s90, 1
    %p94 = scmp.eq.s32.totalorder %s14, 1
    %p95 = scmp.ne.s32.totalorder %s90, %s92
    %p96 = scmp.eq.s32.totalorder %s14, 0
    %p97 = por %p95, %p96
    %p98 = scmp.ne.s32.totalorder %s90, %s92
    %p99 = scmp.eq.s32.totalorder %s19, 1
    %p100 = por %p98, %p99
    %p101 = scmp.ne.s32.totalorder %s92, %s93
    %p102 = scmp.eq.s32.totalorder %s19, 0
    %p103 = por %p101, %p102
    %p104 = scmp.ne.s32.totalorder %s92, %s93
    %p105 = scmp.eq.s32.totalorder %s20, 1
    %p106 = por %p104, %p105
    %p108 = scmp.ne.s32.totalorder %s93, %s107
    %p109 = scmp.eq.s32.totalorder %s20, 0
    %p110 = por %p108, %p109
    %s112 = sadd.s32 %s111, 1
    %p115 = scmp.eq.s32.totalorder %s14, 1
    %p116 = scmp.ne.s32.totalorder %s111, %s113
    %p117 = scmp.eq.s32.totalorder %s14, 0
    %p118 = por %p116, %p117
    %p119 = scmp.ne.s32.totalorder %s111, %s113
    %p120 = scmp.eq.s32.totalorder %s19, 1
    %p121 = por %p119, %p120
    %p122 = scmp.ne.s32.totalorder %s113, %s114
    %p123 = scmp.eq.s32.totalorder %s19, 0
    %p124 = por %p122, %p123
    %p125 = scmp.ne.s32.totalorder %s113, %s114
    %p126 = scmp.eq.s32.totalorder %s20, 1
    %p127 = por %p125, %p126
    %p129 = scmp.ne.s32.totalorder %s114, %s128
    %p130 = scmp.eq.s32.totalorder %s20, 0
    %p131 = por %p129, %p130
    %s133 = sadd.s32 %s132, 1
    %p136 = scmp.eq.s32.totalorder %s14, 1
    %p137 = scmp.ne.s32.totalorder %s132, %s134
    %p138 = scmp.eq.s32.totalorder %s14, 0
    %p139 = por %p137, %p138
    %p140 = scmp.ne.s32.totalorder %s132, %s134
    %p141 = scmp.eq.s32.totalorder %s19, 1
    %p142 = por %p140, %p141
    %p143 = scmp.ne.s32.totalorder %s134, %s135
    %p144 = scmp.eq.s32.totalorder %s19, 0
    %p145 = por %p143, %p144
    %p146 = scmp.ne.s32.totalorder %s134, %s135
    %p147 = scmp.eq.s32.totalorder %s20, 1
    %p148 = por %p146, %p147
    %p150 = scmp.ne.s32.totalorder %s135, %s149
    %p151 = scmp.eq.s32.totalorder %s20, 0
    %p152 = por %p150, %p151
    %s154 = sadd.s32 %s153, 1
    %p157 = scmp.eq.s32.totalorder %s14, 1
    %p158 = scmp.ne.s32.totalorder %s153, %s155
    %p159 = scmp.eq.s32.totalorder %s14, 0
    %p160 = por %p158, %p159
    %p161 = scmp.ne.s32.totalorder %s153, %s155
    %p162 = scmp.eq.s32.totalorder %s19, 1
    %p163 = por %p161, %p162
    %p164 = scmp.ne.s32.totalorder %s155, %s156
    %p165 = scmp.eq.s32.totalorder %s19, 0
    %p166 = por %p164, %p165
    %p167 = scmp.ne.s32.totalorder %s155, %s156
    %p168 = scmp.eq.s32.totalorder %s20, 1
    %p169 = por %p167, %p168
    %p171 = scmp.ne.s32.totalorder %s156, %s170
    %p172 = scmp.eq.s32.totalorder %s20, 0
    %p173 = por %p171, %p172
    %s175 = sadd.s32 %s174, 1
    %p178 = scmp.eq.s32.totalorder %s14, 1
    %p179 = scmp.ne.s32.totalorder %s174, %s176
    %p180 = scmp.eq.s32.totalorder %s14, 0
    %p181 = por %p179, %p180
    %p182 = scmp.ne.s32.totalorder %s174, %s176
    %p183 = scmp.eq.s32.totalorder %s19, 1
    %p184 = por %p182, %p183
    %p185 = scmp.ne.s32.totalorder %s176, %s177
    %p186 = scmp.eq.s32.totalorder %s19, 0
    %p187 = por %p185, %p186
    %p188 = scmp.ne.s32.totalorder %s176, %s177
    %p189 = scmp.eq.s32.totalorder %s20, 1
    %p190 = por %p188, %p189
    %p192 = scmp.ne.s32.totalorder %s177, %s191
    %p193 = scmp.eq.s32.totalorder %s20, 0
    %p194 = por %p192, %p193
    %s195 = ssub.s32 %s14, %s21
    %p196 = scmp.eq.s32.totalorder %s195, 0
    %s198 = sadd.s32 %s197, 1
    %s199 = scalar_select %p196, %s197, %s198
    %p202 = pneg %p196
    %p203 = scmp.eq.s32.totalorder %s14, 1
    %p204 = por %p202, %p203
    %p205 = scmp.ne.s32.totalorder %s197, %s200
    %p206 = scmp.eq.s32.totalorder %s14, 0
    %p207 = por %p205, %p206
    %p208 = scmp.ne.s32.totalorder %s197, %s200
    %p209 = scmp.eq.s32.totalorder %s19, 1
    %p210 = por %p208, %p209
    %p211 = scmp.ne.s32.totalorder %s200, %s201
    %p212 = scmp.eq.s32.totalorder %s19, 0
    %p213 = por %p211, %p212
    %p214 = scmp.ne.s32.totalorder %s200, %s201
    %p215 = scmp.eq.s32.totalorder %s20, 1
    %p216 = por %p214, %p215
    %p218 = scmp.ne.s32.totalorder %s201, %s217
    %p219 = scmp.eq.s32.totalorder %s20, 0
    %p220 = por %p218, %p219
    %p221 = scmp.le.s32.totalorder 1, %s14
    %p222 = scmp.lt.s32.totalorder %s14, 3
    %p223 = pnand %p221, %p222
    %p224 = pneg %p223
    // Predicated region
    $region9: #{fast_esheaf_forward.1} parent=5 // pred_check
      _
    $region10: #{fast_esheaf_forward.1} parent=5 // pred_check_branch
      %226 = sbr.rel (%p223) target = $region12
    $region11: #{fast_esheaf_forward.1} parent=5 // pred_region
      %s227 = ssub.s32 %s14, 1
      // Predicated region
      $region13: #{fast_esheaf_forward.1} parent=11 // pred_check
        %p228 = pneg %p61
      $region14: #{fast_esheaf_forward.1} parent=11 // pred_check_branch
        %230 = sbr.rel (%p228) target = $region16
      $region15: #{fast_esheaf_forward.1} parent=11 // pred_region
        _
      $region16: #{fast_esheaf_forward.1} parent=11 // pred_fallthru
        _
      // Predicated region
      $region17: #{fast_esheaf_forward.1} parent=11 // pred_check
        %p231 = pneg %p82
      $region18: #{fast_esheaf_forward.1} parent=11 // pred_check_branch
        %233 = sbr.rel (%p231) target = $region20
      $region19: #{fast_esheaf_forward.1} parent=11 // pred_region
        _
      $region20: #{fast_esheaf_forward.1} parent=11 // pred_fallthru
        _
      // Predicated region
      $region21: #{fast_esheaf_forward.1} parent=11 // pred_check
        %p234 = pneg %p103
      $region22: #{fast_esheaf_forward.1} parent=11 // pred_check_branch
        %236 = sbr.rel (%p234) target = $region24
      $region23: #{fast_esheaf_forward.1} parent=11 // pred_region
        _
      $region24: #{fast_esheaf_forward.1} parent=11 // pred_fallthru
        _
      // Predicated region
      $region25: #{fast_esheaf_forward.1} parent=11 // pred_check
        %p237 = pneg %p124
      $region26: #{fast_esheaf_forward.1} parent=11 // pred_check_branch
        %239 = sbr.rel (%p237) target = $region28
      $region27: #{fast_esheaf_forward.1} parent=11 // pred_region
        _
      $region28: #{fast_esheaf_forward.1} parent=11 // pred_fallthru
        _
      // Predicated region
      $region29: #{fast_esheaf_forward.1} parent=11 // pred_check
        %p240 = pneg %p145
      $region30: #{fast_esheaf_forward.1} parent=11 // pred_check_branch
        %242 = sbr.rel (%p240) target = $region32
      $region31: #{fast_esheaf_forward.1} parent=11 // pred_region
        _
      $region32: #{fast_esheaf_forward.1} parent=11 // pred_fallthru
        _
      // Predicated region
      $region33: #{fast_esheaf_forward.1} parent=11 // pred_check
        %p243 = pneg %p166
      $region34: #{fast_esheaf_forward.1} parent=11 // pred_check_branch
        %245 = sbr.rel (%p243) target = $region36
      $region35: #{fast_esheaf_forward.1} parent=11 // pred_region
        _
      $region36: #{fast_esheaf_forward.1} parent=11 // pred_fallthru
        _
      // Predicated region
      $region37: #{fast_esheaf_forward.1} parent=11 // pred_check
        %p246 = pneg %p187
      $region38: #{fast_esheaf_forward.1} parent=11 // pred_check_branch
        %248 = sbr.rel (%p246) target = $region40
      $region39: #{fast_esheaf_forward.1} parent=11 // pred_region
        _
      $region40: #{fast_esheaf_forward.1} parent=11 // pred_fallthru
        _
    $region12: #{fast_esheaf_forward.1} parent=5 // pred_fallthru
      _
    %p249 = scmp.lt.s32.totalorder %s14, 2
    // Predicated region
    $region41: #{fast_esheaf_forward.1} parent=5 // pred_check
      %p250 = pneg %p249
    $region42: #{fast_esheaf_forward.1} parent=5 // pred_check_branch
      %252 = sbr.rel (%p250) target = $region44
    $region43: #{fast_esheaf_forward.1} parent=5 // pred_region
      // Predicated region
      $region45: #{fast_esheaf_forward.1} parent=43 // pred_check
        %p253 = pneg %p34
      $region46: #{fast_esheaf_forward.1} parent=43 // pred_check_branch
        %255 = sbr.rel (%p253) target = $region48
      $region47: #{fast_esheaf_forward.1} parent=43 // pred_region
        %s256 = smul.u32 16, %s14
        %p257 = scmp.lt.s32.totalorder %s256, 31
        %s258 = scalar_select %p257, %s256, 31
        %s259 = smul.addr %s258, 8
        %s260 = scalar_lea.vmem %s0, %s259
        %s261 = smul.u32 16, %s14
      $region48: #{fast_esheaf_forward.1} parent=43 // pred_fallthru
        _
    $region44: #{fast_esheaf_forward.1} parent=5 // pred_fallthru
      _
    %p262 = scmp.le.s32.totalorder 1, %s14
    %p263 = scmp.lt.s32.totalorder %s14, 3
    %p264 = pnand %p262, %p263
    %p265 = pneg %p264
    // Predicated region
    $region49: #{fast_esheaf_forward.1} parent=5 // pred_check
      _
    $region50: #{fast_esheaf_forward.1} parent=5 // pred_check_branch
      %267 = sbr.rel (%p264) target = $region52
    $region51: #{fast_esheaf_forward.1} parent=5 // pred_region
      %s268 = ssub.s32 %s14, 1
      %s269 = smul.u32 16, %s19
      %p270 = scmp.lt.s32.totalorder %s269, 31
      %s271 = scalar_select %p270, %s269, 31
      %s272 = smul.addr %s271, 8
      %s273 = scalar_lea.vmem %s0, %s272
      %p274 = pneg %p40
      %p275 = pneg %p37
      %p276 = pneg %p61
      %p277 = pneg %p58
      %p278 = pneg %p82
      %p279 = pneg %p79
      %p280 = pneg %p103
      %p281 = pneg %p100
      %p282 = pneg %p124
      %p283 = pneg %p121
      %p284 = pneg %p145
      %p285 = pneg %p142
      %p286 = pneg %p166
      %p287 = pneg %p163
      %p288 = pneg %p187
      %p289 = pneg %p184
      %p290 = pneg %p213
      %p291 = pneg %p210
      %s292 = smul.u32 16, %s19
      %p293 = scmp.lt.s32.totalorder %s292, 31
      %s294 = scalar_select %p293, %s292, 31
      %s295 = smul.addr %s294, 8
      %s296 = scalar_lea.vmem %s8, %s295
      %s297 = smul.u32 16, %s19
      %p298 = scmp.lt.s32.totalorder %s297, 31
      %s299 = scalar_select %p298, %s297, 31
      %s300 = smul.addr %s299, 8
      %s301 = scalar_lea.vmem %s0, %s300
      %s302 = smul.u32 16, %s19
      %s303 = smul.u32 16, %s19
      %p304 = scmp.lt.s32.totalorder %s303, 31
      %s305 = scalar_select %p304, %s303, 31
      %s306 = smul.addr %s305, 8
      %s307 = scalar_lea.vmem %s8, %s306
      %s308 = smul.u32 16, %s19
      %v310 = vld [vmem:[%s301] sm:$0xff]
      %v311 = vld [vmem:[%s301 + $0x8] sm:$0xff]
      %v312 = vld [vmem:[%s301 + $0x10] sm:$0xff]
      %v313 = vld [vmem:[%s301 + $0x18] sm:$0xff]
      %v314 = vld [vmem:[%s301 + $0x20] sm:$0xff]
      %v315 = vld [vmem:[%s301 + $0x28] sm:$0xff]
      %v316 = vld [vmem:[%s301 + $0x30] sm:$0xff]
      %v317 = vld [vmem:[%s301 + $0x38] sm:$0xff]
      %v318 = vld [vmem:[%s301 + $0x40] sm:$0xff]
      %v319 = vld [vmem:[%s301 + $0x48] sm:$0xff]
      %v320 = vld [vmem:[%s301 + $0x50] sm:$0xff]
      %v321 = vld [vmem:[%s301 + $0x58] sm:$0xff]
      %v322 = vld [vmem:[%s301 + $0x60] sm:$0xff]
      %v323 = vld [vmem:[%s301 + $0x68] sm:$0xff]
      %v324 = vld [vmem:[%s301 + $0x70] sm:$0xff]
      %v325 = vld [vmem:[%s301 + $0x78] sm:$0xff]
      %v326 = vpack.c.bf16 %v311, %v310
      %v327 = vpack.c.bf16 %v313, %v312
      %v328 = vpack.c.bf16 %v315, %v314
      %v329 = vpack.c.bf16 %v317, %v316
      %v330 = vpack.c.bf16 %v319, %v318
      %v331 = vpack.c.bf16 %v321, %v320
      %v332 = vpack.c.bf16 %v323, %v322
      %v333 = vpack.c.bf16 %v325, %v324
      %v334 = vld [vmem:[%s1] sm:$0xf]
      %v335 = vld [vmem:[%s1 + $0x4] sm:$0xf]
      %v336 = vld [vmem:[%s1 + $0x8] sm:$0xf]
      %v337 = vld [vmem:[%s1 + $0xc] sm:$0xf]
      %v338 = vld [vmem:[%s2] sm:$0x1]
      %v340 = vlaneseq
      %v341 = vshrl.u32 %v340, 7
      %v342 = vsub.s32 0, %v341
      %v343 = vrot.slane %v338, %v342
      %v349 = vunpack.c.l.b16 %v334
      %v350 = vunpack.c.l.b16 %v335
      %v351 = vunpack.c.l.b16 %v336
      %v352 = vunpack.c.l.b16 %v337
      %v353 = vpack.c.b16 %v350, %v349
      %v354 = vpack.c.b16 %v352, %v351
      %vm357 = vcmask 261120
      %v359 = vsel %vm357, %v326, 0
      %v362 = vsel %vm357, %v327, 0
      %v365 = vsel %vm357, %v328, 0
      %v368 = vsel %vm357, %v329, 0
      %v371 = vsel %vm357, %v330, 0
      %v374 = vsel %vm357, %v331, 0
      %v377 = vsel %vm357, %v332, 0
      %v380 = vsel %vm357, %v333, 0
      %382 = vmatprep.subr.bf16.mxu0 0
      %383 = vmatpush1.bf16.msra.mxu0 %v353
      %384 = vmatprep.subr.bf16.mxu0 0
      %385 = vmatpush1.bf16.msra.mxu0 %v354
      %386 = vmatprep.subr.bf16.mxu0 0
      %387 = vmatpush1.bf16.msra.mxu0 0
      %388 = vmatprep.subr.bf16.mxu0 0
      %389 = vmatpush1.bf16.msra.mxu0 0
      %390 = vmatprep.subr.bf16.mxu0 0
      %391 = vmatpush1.bf16.msra.mxu0 0
      %392 = vmatprep.subr.bf16.mxu0 0
      %393 = vmatpush1.bf16.msra.mxu0 0
      %394 = vmatprep.subr.bf16.mxu0 0
      %395 = vmatpush1.bf16.msra.mxu0 0
      %396 = vmatprep.subr.bf16.mxu0 0
      %397 = vmatpush1.bf16.msra.mxu0 0
      %398 = vmatprep.subr.bf16.mxu0 0
      %399 = vmatpush1.bf16.msra.mxu0 0
      %400 = vmatprep.subr.bf16.mxu0 0
      %401 = vmatpush1.bf16.msra.mxu0 0
      %402 = vmatprep.subr.bf16.mxu0 0
      %403 = vmatpush1.bf16.msra.mxu0 0
      %404 = vmatprep.subr.bf16.mxu0 0
      %405 = vmatpush1.bf16.msra.mxu0 0
      %406 = vmatprep.subr.bf16.mxu0 0
      %407 = vmatpush1.bf16.msra.mxu0 0
      %408 = vmatprep.subr.bf16.mxu0 0
      %409 = vmatpush1.bf16.msra.mxu0 0
      %410 = vmatprep.subr.bf16.mxu0 0
      %411 = vmatpush1.bf16.msra.mxu0 0
      %412 = vmatprep.subr.bf16.mxu0 0
      %413 = vmatpush1.bf16.msra.mxu0 0
      %414 = vmatprep.mubr.bf16.mxu0 0
      %415 = vmatmul.mubr.bf16.gmra.mrb[0].mxu0 %v359
      %v416 = vpop.f32.mrb[0].mxu0
      %v417 = vadd.f32 %v343, %v416
      %v418 = vpop.f32.mrb[0].mxu0
      %v419 = vpop.f32.mrb[0].mxu0
      %v420 = vadd.f32 %v343, %v419
      %v421 = vpop.f32.mrb[0].mxu0
      %422 = vmatprep.mubr.bf16.mxu0 0
      %423 = vmatmul.mubr.bf16.gmra.mrb[0].mxu0 %v362
      %v424 = vpop.f32.mrb[0].mxu0
      %v425 = vadd.f32 %v343, %v424
      %v426 = vpop.f32.mrb[0].mxu0
      %v427 = vpop.f32.mrb[0].mxu0
      %v428 = vadd.f32 %v343, %v427
      %v429 = vpop.f32.mrb[0].mxu0
      %430 = vmatprep.mubr.bf16.mxu0 0
      %431 = vmatmul.mubr.bf16.gmra.mrb[0].mxu0 %v365
      %v432 = vpop.f32.mrb[0].mxu0
      %v433 = vadd.f32 %v343, %v432
      %v434 = vpop.f32.mrb[0].mxu0
      %v435 = vpop.f32.mrb[0].mxu0
      %v436 = vadd.f32 %v343, %v435
      %v437 = vpop.f32.mrb[0].mxu0
      %438 = vmatprep.mubr.bf16.mxu0 0
      %439 = vmatmul.mubr.bf16.gmra.mrb[0].mxu0 %v368
      %v440 = vpop.f32.mrb[0].mxu0
      %v441 = vadd.f32 %v343, %v440
      %v442 = vpop.f32.mrb[0].mxu0
      %v443 = vpop.f32.mrb[0].mxu0
      %v444 = vadd.f32 %v343, %v443
      %v445 = vpop.f32.mrb[0].mxu0
      %446 = vmatprep.mubr.bf16.mxu0 0
      %447 = vmatmul.mubr.bf16.gmra.mrb[0].mxu0 %v371
      %v448 = vpop.f32.mrb[0].mxu0
      %v449 = vadd.f32 %v343, %v448
      %v450 = vpop.f32.mrb[0].mxu0
      %v451 = vpop.f32.mrb[0].mxu0
      %v452 = vadd.f32 %v343, %v451
      %v453 = vpop.f32.mrb[0].mxu0
      %454 = vmatprep.mubr.bf16.mxu0 0
      %455 = vmatmul.mubr.bf16.gmra.mrb[0].mxu0 %v374
      %v456 = vpop.f32.mrb[0].mxu0
      %v457 = vadd.f32 %v343, %v456
      %v458 = vpop.f32.mrb[0].mxu0
      %v459 = vpop.f32.mrb[0].mxu0
      %v460 = vadd.f32 %v343, %v459
      %v461 = vpop.f32.mrb[0].mxu0
      %462 = vmatprep.mubr.bf16.mxu0 0
      %463 = vmatmul.mubr.bf16.gmra.mrb[0].mxu0 %v377
      %v464 = vpop.f32.mrb[0].mxu0
      %v465 = vadd.f32 %v343, %v464
      %v466 = vpop.f32.mrb[0].mxu0
      %v467 = vpop.f32.mrb[0].mxu0
      %v468 = vadd.f32 %v343, %v467
      %v469 = vpop.f32.mrb[0].mxu0
      %470 = vmatprep.mubr.bf16.mxu0 0
      %471 = vmatmul.mubr.bf16.gmra.mrb[0].mxu0 %v380
      %v472 = vpop.f32.mrb[0].mxu0
      %v473 = vadd.f32 %v343, %v472
      %v474 = vpop.f32.mrb[0].mxu0
      %v475 = vpop.f32.mrb[0].mxu0
      %v476 = vadd.f32 %v343, %v475
      %v477 = vpop.f32.mrb[0].mxu0
      %478 = vdwg.mxu0
      %v479 = vmax.f32 %v417, 0.0
      %v480 = vmax.f32 %v420, 0.0
      %v481 = vmax.f32 %v425, 0.0
      %v482 = vmax.f32 %v428, 0.0
      %v483 = vmax.f32 %v433, 0.0
      %v484 = vmax.f32 %v436, 0.0
      %v485 = vmax.f32 %v441, 0.0
      %v486 = vmax.f32 %v444, 0.0
      %v487 = vmax.f32 %v449, 0.0
      %v488 = vmax.f32 %v452, 0.0
      %v489 = vmax.f32 %v457, 0.0
      %v490 = vmax.f32 %v460, 0.0
      %v491 = vmax.f32 %v465, 0.0
      %v492 = vmax.f32 %v468, 0.0
      %v493 = vmax.f32 %v473, 0.0
      %v494 = vmax.f32 %v476, 0.0
      %v495 = vpack.c.bf16 %v480, %v479
      %v496 = vpack.c.bf16 %v482, %v481
      %v497 = vpack.c.bf16 %v484, %v483
      %v498 = vpack.c.bf16 %v486, %v485
      %v499 = vpack.c.bf16 %v488, %v487
      %v500 = vpack.c.bf16 %v490, %v489
      %v501 = vpack.c.bf16 %v492, %v491
      %v502 = vpack.c.bf16 %v494, %v493
      %v503 = vld [vmem:[%s3] sm:$0xf]
      %v504 = vld [vmem:[%s3 + $0x4] sm:$0xf]
      %v505 = vld [vmem:[%s3 + $0x8] sm:$0xf]
      %v506 = vld [vmem:[%s3 + $0xc] sm:$0xf]
      %v507 = vld [vmem:[%s3 + $0x10] sm:$0xf]
      %v508 = vld [vmem:[%s3 + $0x14] sm:$0xf]
      %v509 = vld [vmem:[%s3 + $0x18] sm:$0xf]
      %v510 = vld [vmem:[%s3 + $0x1c] sm:$0xf]
      %v511 = vld [vmem:[%s4] sm:$0x1]
      %v513 = vlaneseq
      %v514 = vshrl.u32 %v513, 7
      %v515 = vsub.s32 0, %v514
      %v516 = vrot.slane %v511, %v515
      %v526 = vunpack.c.l.b16 %v503
      %v527 = vunpack.c.l.b16 %v504
      %v528 = vunpack.c.l.b16 %v505
      %v529 = vunpack.c.l.b16 %v506
      %v530 = vunpack.c.l.b16 %v507
      %v531 = vunpack.c.l.b16 %v508
      %v532 = vunpack.c.l.b16 %v509
      %v533 = vunpack.c.l.b16 %v510
      %v534 = vpack.c.b16 %v527, %v526
      %v535 = vpack.c.b16 %v529, %v528
      %v536 = vpack.c.b16 %v531, %v530
      %v537 = vpack.c.b16 %v533, %v532
      %vm542 = vcmask 523264
      %v544 = vsel %vm542, %v495, 0
      %v547 = vsel %vm542, %v496, 0
      %v550 = vsel %vm542, %v497, 0
      %v553 = vsel %vm542, %v498, 0
      %v556 = vsel %vm542, %v499, 0
      %v559 = vsel %vm542, %v500, 0
      %v562 = vsel %vm542, %v501, 0
      %v565 = vsel %vm542, %v502, 0
      %567 = vmatprep.subr.bf16.mxu0 0
      %568 = vmatpush1.bf16.msra.mxu0 %v534
      %569 = vmatprep.subr.bf16.mxu0 0
      %570 = vmatpush1.bf16.msra.mxu0 %v535
      %571 = vmatprep.subr.bf16.mxu0 0
      %572 = vmatpush1.bf16.msra.mxu0 %v536
      %573 = vmatprep.subr.bf16.mxu0 0
      %574 = vmatpush1.bf16.msra.mxu0 %v537
      %575 = vmatprep.subr.bf16.mxu0 0
      %576 = vmatpush1.bf16.msra.mxu0 0
      %577 = vmatprep.subr.bf16.mxu0 0
      %578 = vmatpush1.bf16.msra.mxu0 0
      %579 = vmatprep.subr.bf16.mxu0 0
      %580 = vmatpush1.bf16.msra.mxu0 0
      %581 = vmatprep.subr.bf16.mxu0 0
      %582 = vmatpush1.bf16.msra.mxu0 0
      %583 = vmatprep.subr.bf16.mxu0 0
      %584 = vmatpush1.bf16.msra.mxu0 0
      %585 = vmatprep.subr.bf16.mxu0 0
      %586 = vmatpush1.bf16.msra.mxu0 0
      %587 = vmatprep.subr.bf16.mxu0 0
      %588 = vmatpush1.bf16.msra.mxu0 0
      %589 = vmatprep.subr.bf16.mxu0 0
      %590 = vmatpush1.bf16.msra.mxu0 0
      %591 = vmatprep.subr.bf16.mxu0 0
      %592 = vmatpush1.bf16.msra.mxu0 0
      %593 = vmatprep.subr.bf16.mxu0 0
      %594 = vmatpush1.bf16.msra.mxu0 0
      %595 = vmatprep.subr.bf16.mxu0 0
      %596 = vmatpush1.bf16.msra.mxu0 0
      %597 = vmatprep.subr.bf16.mxu0 0
      %598 = vmatpush1.bf16.msra.mxu0 0
      %599 = vmatprep.mubr.bf16.mxu0 0
      %600 = vmatmul.mubr.bf16.gmra.mrb[0].mxu0 %v544
      %v601 = vpop.f32.mrb[0].mxu0
      %v602 = vadd.f32 %v516, %v601
      %v603 = vpop.f32.mrb[0].mxu0
      %v604 = vpop.f32.mrb[0].mxu0
      %v605 = vadd.f32 %v516, %v604
      %v606 = vpop.f32.mrb[0].mxu0
      %607 = vmatprep.mubr.bf16.mxu0 0
      %608 = vmatmul.mubr.bf16.gmra.mrb[0].mxu0 %v547
      %v609 = vpop.f32.mrb[0].mxu0
      %v610 = vadd.f32 %v516, %v609
      %v611 = vpop.f32.mrb[0].mxu0
      %v612 = vpop.f32.mrb[0].mxu0
      %v613 = vadd.f32 %v516, %v612
      %v614 = vpop.f32.mrb[0].mxu0
      %615 = vmatprep.mubr.bf16.mxu0 0
      %616 = vmatmul.mubr.bf16.gmra.mrb[0].mxu0 %v550
      %v617 = vpop.f32.mrb[0].mxu0
      %v618 = vadd.f32 %v516, %v617
      %v619 = vpop.f32.mrb[0].mxu0
      %v620 = vpop.f32.mrb[0].mxu0
      %v621 = vadd.f32 %v516, %v620
      %v622 = vpop.f32.mrb[0].mxu0
      %623 = vmatprep.mubr.bf16.mxu0 0
      %624 = vmatmul.mubr.bf16.gmra.mrb[0].mxu0 %v553
      %v625 = vpop.f32.mrb[0].mxu0
      %v626 = vadd.f32 %v516, %v625
      %v627 = vpop.f32.mrb[0].mxu0
      %v628 = vpop.f32.mrb[0].mxu0
      %v629 = vadd.f32 %v516, %v628
      %v630 = vpop.f32.mrb[0].mxu0
      %631 = vmatprep.mubr.bf16.mxu0 0
      %632 = vmatmul.mubr.bf16.gmra.mrb[0].mxu0 %v556
      %v633 = vpop.f32.mrb[0].mxu0
      %v634 = vadd.f32 %v516, %v633
      %v635 = vpop.f32.mrb[0].mxu0
      %v636 = vpop.f32.mrb[0].mxu0
      %v637 = vadd.f32 %v516, %v636
      %v638 = vpop.f32.mrb[0].mxu0
      %639 = vmatprep.mubr.bf16.mxu0 0
      %640 = vmatmul.mubr.bf16.gmra.mrb[0].mxu0 %v559
      %v641 = vpop.f32.mrb[0].mxu0
      %v642 = vadd.f32 %v516, %v641
      %v643 = vpop.f32.mrb[0].mxu0
      %v644 = vpop.f32.mrb[0].mxu0
      %v645 = vadd.f32 %v516, %v644
      %v646 = vpop.f32.mrb[0].mxu0
      %647 = vmatprep.mubr.bf16.mxu0 0
      %648 = vmatmul.mubr.bf16.gmra.mrb[0].mxu0 %v562
      %v649 = vpop.f32.mrb[0].mxu0
      %v650 = vadd.f32 %v516, %v649
      %v651 = vpop.f32.mrb[0].mxu0
      %v652 = vpop.f32.mrb[0].mxu0
      %v653 = vadd.f32 %v516, %v652
      %v654 = vpop.f32.mrb[0].mxu0
      %655 = vmatprep.mubr.bf16.mxu0 0
      %656 = vmatmul.mubr.bf16.gmra.mrb[0].mxu0 %v565
      %v657 = vpop.f32.mrb[0].mxu0
      %v658 = vadd.f32 %v516, %v657
      %v659 = vpop.f32.mrb[0].mxu0
      %v660 = vpop.f32.mrb[0].mxu0
      %v661 = vadd.f32 %v516, %v660
      %v662 = vpop.f32.mrb[0].mxu0
      %663 = vdwg.mxu0
      %v664 = vmax.f32 %v602, 0.0
      %v665 = vmax.f32 %v605, 0.0
      %v666 = vmax.f32 %v610, 0.0
      %v667 = vmax.f32 %v613, 0.0
      %v668 = vmax.f32 %v618, 0.0
      %v669 = vmax.f32 %v621, 0.0
      %v670 = vmax.f32 %v626, 0.0
      %v671 = vmax.f32 %v629, 0.0
      %v672 = vmax.f32 %v634, 0.0
      %v673 = vmax.f32 %v637, 0.0
      %v674 = vmax.f32 %v642, 0.0
      %v675 = vmax.f32 %v645, 0.0
      %v676 = vmax.f32 %v650, 0.0
      %v677 = vmax.f32 %v653, 0.0
      %v678 = vmax.f32 %v658, 0.0
      %v679 = vmax.f32 %v661, 0.0
      %v680 = vpack.c.bf16 %v665, %v664
      %v681 = vpack.c.bf16 %v667, %v666
      %v682 = vpack.c.bf16 %v669, %v668
      %v683 = vpack.c.bf16 %v671, %v670
      %v684 = vpack.c.bf16 %v673, %v672
      %v685 = vpack.c.bf16 %v675, %v674
      %v686 = vpack.c.bf16 %v677, %v676
      %v687 = vpack.c.bf16 %v679, %v678
      %s688 = scalar_lea.vmem %s3, 32
      %v689 = vld [vmem:[%s688] sm:$0xf]
      %v690 = vld [vmem:[%s688 + $0x4] sm:$0xf]
      %v691 = vld [vmem:[%s688 + $0x8] sm:$0xf]
      %v692 = vld [vmem:[%s688 + $0xc] sm:$0xf]
      %v693 = vld [vmem:[%s688 + $0x10] sm:$0xf]
      %v694 = vld [vmem:[%s688 + $0x14] sm:$0xf]
      %v695 = vld [vmem:[%s688 + $0x18] sm:$0xf]
      %v696 = vld [vmem:[%s688 + $0x1c] sm:$0xf]
      %s697 = scalar_lea.vmem %s4, 1
      %v698 = vld [vmem:[%s697] sm:$0x1]
      %v700 = vlaneseq
      %v701 = vshrl.u32 %v700, 7
      %v702 = vsub.s32 0, %v701
      %v703 = vrot.slane %v698, %v702
      %v713 = vunpack.c.l.b16 %v689
      %v714 = vunpack.c.l.b16 %v690
      %v715 = vunpack.c.l.b16 %v691
      %v716 = vunpack.c.l.b16 %v692
      %v717 = vunpack.c.l.b16 %v693
      %v718 = vunpack.c.l.b16 %v694
      %v719 = vunpack.c.l.b16 %v695
      %v720 = vunpack.c.l.b16 %v696
      %v721 = vpack.c.b16 %v714, %v713
      %v722 = vpack.c.b16 %v716, %v715
      %v723 = vpack.c.b16 %v718, %v717
      %v724 = vpack.c.b16 %v720, %v719
      %v730 = vsel %vm542, %v680, 0
      %v733 = vsel %vm542, %v681, 0
      %v736 = vsel %vm542, %v682, 0
      %v739 = vsel %vm542, %v683, 0
      %v742 = vsel %vm542, %v684, 0
      %v745 = vsel %vm542, %v685, 0
      %v748 = vsel %vm542, %v686, 0
      %v751 = vsel %vm542, %v687, 0
      %753 = vmatprep.subr.bf16.mxu0 0
      %754 = vmatpush1.bf16.msra.mxu0 %v721
      %755 = vmatprep.subr.bf16.mxu0 0
      %756 = vmatpush1.bf16.msra.mxu0 %v722
      %757 = vmatprep.subr.bf16.mxu0 0
      %758 = vmatpush1.bf16.msra.mxu0 %v723
      %759 = vmatprep.subr.bf16.mxu0 0
      %760 = vmatpush1.bf16.msra.mxu0 %v724
      %761 = vmatprep.subr.bf16.mxu0 0
      %762 = vmatpush1.bf16.msra.mxu0 0
      %763 = vmatprep.subr.bf16.mxu0 0
      %764 = vmatpush1.bf16.msra.mxu0 0
      %765 = vmatprep.subr.bf16.mxu0 0
      %766 = vmatpush1.bf16.msra.mxu0 0
      %767 = vmatprep.subr.bf16.mxu0 0
      %768 = vmatpush1.bf16.msra.mxu0 0
      %769 = vmatprep.subr.bf16.mxu0 0
      %770 = vmatpush1.bf16.msra.mxu0 0
      %771 = vmatprep.subr.bf16.mxu0 0
      %772 = vmatpush1.bf16.msra.mxu0 0
      %773 = vmatprep.subr.bf16.mxu0 0
      %774 = vmatpush1.bf16.msra.mxu0 0
      %775 = vmatprep.subr.bf16.mxu0 0
      %776 = vmatpush1.bf16.msra.mxu0 0
      %777 = vmatprep.subr.bf16.mxu0 0
      %778 = vmatpush1.bf16.msra.mxu0 0
      %779 = vmatprep.subr.bf16.mxu0 0
      %780 = vmatpush1.bf16.msra.mxu0 0
      %781 = vmatprep.subr.bf16.mxu0 0
      %782 = vmatpush1.bf16.msra.mxu0 0
      %783 = vmatprep.subr.bf16.mxu0 0
      %784 = vmatpush1.bf16.msra.mxu0 0
      %785 = vmatprep.mubr.bf16.mxu0 0
      %786 = vmatmul.mubr.bf16.gmra.mrb[0].mxu0 %v730
      %v787 = vpop.f32.mrb[0].mxu0
      %v788 = vadd.f32 %v703, %v787
      %v789 = vpop.f32.mrb[0].mxu0
      %v790 = vpop.f32.mrb[0].mxu0
      %v791 = vadd.f32 %v703, %v790
      %v792 = vpop.f32.mrb[0].mxu0
      %793 = vmatprep.mubr.bf16.mxu0 0
      %794 = vmatmul.mubr.bf16.gmra.mrb[0].mxu0 %v733
      %v795 = vpop.f32.mrb[0].mxu0
      %v796 = vadd.f32 %v703, %v795
      %v797 = vpop.f32.mrb[0].mxu0
      %v798 = vpop.f32.mrb[0].mxu0
      %v799 = vadd.f32 %v703, %v798
      %v800 = vpop.f32.mrb[0].mxu0
      %801 = vmatprep.mubr.bf16.mxu0 0
      %802 = vmatmul.mubr.bf16.gmra.mrb[0].mxu0 %v736
      %v803 = vpop.f32.mrb[0].mxu0
      %v804 = vadd.f32 %v703, %v803
      %v805 = vpop.f32.mrb[0].mxu0
      %v806 = vpop.f32.mrb[0].mxu0
      %v807 = vadd.f32 %v703, %v806
      %v808 = vpop.f32.mrb[0].mxu0
      %809 = vmatprep.mubr.bf16.mxu0 0
      %810 = vmatmul.mubr.bf16.gmra.mrb[0].mxu0 %v739
      %v811 = vpop.f32.mrb[0].mxu0
      %v812 = vadd.f32 %v703, %v811
      %v813 = vpop.f32.mrb[0].mxu0
      %v814 = vpop.f32.mrb[0].mxu0
      %v815 = vadd.f32 %v703, %v814
      %v816 = vpop.f32.mrb[0].mxu0
      %817 = vmatprep.mubr.bf16.mxu0 0
      %818 = vmatmul.mubr.bf16.gmra.mrb[0].mxu0 %v742
      %v819 = vpop.f32.mrb[0].mxu0
      %v820 = vadd.f32 %v703, %v819
      %v821 = vpop.f32.mrb[0].mxu0
      %v822 = vpop.f32.mrb[0].mxu0
      %v823 = vadd.f32 %v703, %v822
      %v824 = vpop.f32.mrb[0].mxu0
      %825 = vmatprep.mubr.bf16.mxu0 0
      %826 = vmatmul.mubr.bf16.gmra.mrb[0].mxu0 %v745
      %v827 = vpop.f32.mrb[0].mxu0
      %v828 = vadd.f32 %v703, %v827
      %v829 = vpop.f32.mrb[0].mxu0
      %v830 = vpop.f32.mrb[0].mxu0
      %v831 = vadd.f32 %v703, %v830
      %v832 = vpop.f32.mrb[0].mxu0
      %833 = vmatprep.mubr.bf16.mxu0 0
      %834 = vmatmul.mubr.bf16.gmra.mrb[0].mxu0 %v748
      %v835 = vpop.f32.mrb[0].mxu0
      %v836 = vadd.f32 %v703, %v835
      %v837 = vpop.f32.mrb[0].mxu0
      %v838 = vpop.f32.mrb[0].mxu0
      %v839 = vadd.f32 %v703, %v838
      %v840 = vpop.f32.mrb[0].mxu0
      %841 = vmatprep.mubr.bf16.mxu0 0
      %842 = vmatmul.mubr.bf16.gmra.mrb[0].mxu0 %v751
      %v843 = vpop.f32.mrb[0].mxu0
      %v844 = vadd.f32 %v703, %v843
      %v845 = vpop.f32.mrb[0].mxu0
      %v846 = vpop.f32.mrb[0].mxu0
      %v847 = vadd.f32 %v703, %v846
      %v848 = vpop.f32.mrb[0].mxu0
      %849 = vdwg.mxu0
      %v850 = vmax.f32 %v788, 0.0
      %v851 = vmax.f32 %v791, 0.0
      %v852 = vmax.f32 %v796, 0.0
      %v853 = vmax.f32 %v799, 0.0
      %v854 = vmax.f32 %v804, 0.0
      %v855 = vmax.f32 %v807, 0.0
      %v856 = vmax.f32 %v812, 0.0
      %v857 = vmax.f32 %v815, 0.0
      %v858 = vmax.f32 %v820, 0.0
      %v859 = vmax.f32 %v823, 0.0
      %v860 = vmax.f32 %v828, 0.0
      %v861 = vmax.f32 %v831, 0.0
      %v862 = vmax.f32 %v836, 0.0
      %v863 = vmax.f32 %v839, 0.0
      %v864 = vmax.f32 %v844, 0.0
      %v865 = vmax.f32 %v847, 0.0
      %v866 = vpack.c.bf16 %v851, %v850
      %v867 = vpack.c.bf16 %v853, %v852
      %v868 = vpack.c.bf16 %v855, %v854
      %v869 = vpack.c.bf16 %v857, %v856
      %v870 = vpack.c.bf16 %v859, %v858
      %v871 = vpack.c.bf16 %v861, %v860
      %v872 = vpack.c.bf16 %v863, %v862
      %v873 = vpack.c.bf16 %v865, %v864
      %s874 = scalar_lea.vmem %s3, 64
      %v875 = vld [vmem:[%s874] sm:$0xf]
      %v876 = vld [vmem:[%s874 + $0x4] sm:$0xf]
      %v877 = vld [vmem:[%s874 + $0x8] sm:$0xf]
      %v878 = vld [vmem:[%s874 + $0xc] sm:$0xf]
      %v879 = vld [vmem:[%s874 + $0x10] sm:$0xf]
      %v880 = vld [vmem:[%s874 + $0x14] sm:$0xf]
      %v881 = vld [vmem:[%s874 + $0x18] sm:$0xf]
      %v882 = vld [vmem:[%s874 + $0x1c] sm:$0xf]
      %s883 = scalar_lea.vmem %s4, 2
      %v884 = vld [vmem:[%s883] sm:$0x1]
      %v886 = vlaneseq
      %v887 = vshrl.u32 %v886, 7
      %v888 = vsub.s32 0, %v887
      %v889 = vrot.slane %v884, %v888
      %v899 = vunpack.c.l.b16 %v875
      %v900 = vunpack.c.l.b16 %v876
      %v901 = vunpack.c.l.b16 %v877
      %v902 = vunpack.c.l.b16 %v878
      %v903 = vunpack.c.l.b16 %v879
      %v904 = vunpack.c.l.b16 %v880
      %v905 = vunpack.c.l.b16 %v881
      %v906 = vunpack.c.l.b16 %v882
      %v907 = vpack.c.b16 %v900, %v899
      %v908 = vpack.c.b16 %v902, %v901
      %v909 = vpack.c.b16 %v904, %v903
      %v910 = vpack.c.b16 %v906, %v905
      %v916 = vsel %vm542, %v866, 0
      %v919 = vsel %vm542, %v867, 0
      %v922 = vsel %vm542, %v868, 0
      %v925 = vsel %vm542, %v869, 0
      %v928 = vsel %vm542, %v870, 0
      %v931 = vsel %vm542, %v871, 0
      %v934 = vsel %vm542, %v872, 0
      %v937 = vsel %vm542, %v873, 0
      %939 = vmatprep.subr.bf16.mxu0 0
      %940 = vmatpush1.bf16.msra.mxu0 %v907
      %941 = vmatprep.subr.bf16.mxu0 0
      %942 = vmatpush1.bf16.msra.mxu0 %v908
      %943 = vmatprep.subr.bf16.mxu0 0
      %944 = vmatpush1.bf16.msra.mxu0 %v909
      %945 = vmatprep.subr.bf16.mxu0 0
      %946 = vmatpush1.bf16.msra.mxu0 %v910
      %947 = vmatprep.subr.bf16.mxu0 0
      %948 = vmatpush1.bf16.msra.mxu0 0
      %949 = vmatprep.subr.bf16.mxu0 0
      %950 = vmatpush1.bf16.msra.mxu0 0
      %951 = vmatprep.subr.bf16.mxu0 0
      %952 = vmatpush1.bf16.msra.mxu0 0
      %953 = vmatprep.subr.bf16.mxu0 0
      %954 = vmatpush1.bf16.msra.mxu0 0
      %955 = vmatprep.subr.bf16.mxu0 0
      %956 = vmatpush1.bf16.msra.mxu0 0
      %957 = vmatprep.subr.bf16.mxu0 0
      %958 = vmatpush1.bf16.msra.mxu0 0
      %959 = vmatprep.subr.bf16.mxu0 0
      %960 = vmatpush1.bf16.msra.mxu0 0
      %961 = vmatprep.subr.bf16.mxu0 0
      %962 = vmatpush1.bf16.msra.mxu0 0
      %963 = vmatprep.subr.bf16.mxu0 0
      %964 = vmatpush1.bf16.msra.mxu0 0
      %965 = vmatprep.subr.bf16.mxu0 0
      %966 = vmatpush1.bf16.msra.mxu0 0
      %967 = vmatprep.subr.bf16.mxu0 0
      %968 = vmatpush1.bf16.msra.mxu0 0
      %969 = vmatprep.subr.bf16.mxu0 0
      %970 = vmatpush1.bf16.msra.mxu0 0
      %971 = vmatprep.mubr.bf16.mxu0 0
      %972 = vmatmul.mubr.bf16.gmra.mrb[0].mxu0 %v916
      %v973 = vpop.f32.mrb[0].mxu0
      %v974 = vadd.f32 %v889, %v973
      %v975 = vpop.f32.mrb[0].mxu0
      %v976 = vpop.f32.mrb[0].mxu0
      %v977 = vadd.f32 %v889, %v976
      %v978 = vpop.f32.mrb[0].mxu0
      %979 = vmatprep.mubr.bf16.mxu0 0
      %980 = vmatmul.mubr.bf16.gmra.mrb[0].mxu0 %v919
      %v981 = vpop.f32.mrb[0].mxu0
      %v982 = vadd.f32 %v889, %v981
      %v983 = vpop.f32.mrb[0].mxu0
      %v984 = vpop.f32.mrb[0].mxu0
      %v985 = vadd.f32 %v889, %v984
      %v986 = vpop.f32.mrb[0].mxu0
      %987 = vmatprep.mubr.bf16.mxu0 0
      %988 = vmatmul.mubr.bf16.gmra.mrb[0].mxu0 %v922
      %v989 = vpop.f32.mrb[0].mxu0
      %v990 = vadd.f32 %v889, %v989
      %v991 = vpop.f32.mrb[0].mxu0
      %v992 = vpop.f32.mrb[0].mxu0
      %v993 = vadd.f32 %v889, %v992
      %v994 = vpop.f32.mrb[0].mxu0
      %995 = vmatprep.mubr.bf16.mxu0 0
      %996 = vmatmul.mubr.bf16.gmra.mrb[0].mxu0 %v925
      %v997 = vpop.f32.mrb[0].mxu0
      %v998 = vadd.f32 %v889, %v997
      %v999 = vpop.f32.mrb[0].mxu0
      %v1000 = vpop.f32.mrb[0].mxu0
      %v1001 = vadd.f32 %v889, %v1000
      %v1002 = vpop.f32.mrb[0].mxu0
      %1003 = vmatprep.mubr.bf16.mxu0 0
      %1004 = vmatmul.mubr.bf16.gmra.mrb[0].mxu0 %v928
      %v1005 = vpop.f32.mrb[0].mxu0
      %v1006 = vadd.f32 %v889, %v1005
      %v1007 = vpop.f32.mrb[0].mxu0
      %v1008 = vpop.f32.mrb[0].mxu0
      %v1009 = vadd.f32 %v889, %v1008
      %v1010 = vpop.f32.mrb[0].mxu0
      %1011 = vmatprep.mubr.bf16.mxu0 0
      %1012 = vmatmul.mubr.bf16.gmra.mrb[0].mxu0 %v931
      %v1013 = vpop.f32.mrb[0].mxu0
      %v1014 = vadd.f32 %v889, %v1013
      %v1015 = vpop.f32.mrb[0].mxu0
      %v1016 = vpop.f32.mrb[0].mxu0
      %v1017 = vadd.f32 %v889, %v1016
      %v1018 = vpop.f32.mrb[0].mxu0
      %1019 = vmatprep.mubr.bf16.mxu0 0
      %1020 = vmatmul.mubr.bf16.gmra.mrb[0].mxu0 %v934
      %v1021 = vpop.f32.mrb[0].mxu0
      %v1022 = vadd.f32 %v889, %v1021
      %v1023 = vpop.f32.mrb[0].mxu0
      %v1024 = vpop.f32.mrb[0].mxu0
      %v1025 = vadd.f32 %v889, %v1024
      %v1026 = vpop.f32.mrb[0].mxu0
      %1027 = vmatprep.mubr.bf16.mxu0 0
      %1028 = vmatmul.mubr.bf16.gmra.mrb[0].mxu0 %v937
      %v1029 = vpop.f32.mrb[0].mxu0
      %v1030 = vadd.f32 %v889, %v1029
      %v1031 = vpop.f32.mrb[0].mxu0
      %v1032 = vpop.f32.mrb[0].mxu0
      %v1033 = vadd.f32 %v889, %v1032
      %v1034 = vpop.f32.mrb[0].mxu0
      %1035 = vdwg.mxu0
      %v1036 = vmax.f32 %v974, 0.0
      %v1037 = vmax.f32 %v977, 0.0
      %v1038 = vmax.f32 %v982, 0.0
      %v1039 = vmax.f32 %v985, 0.0
      %v1040 = vmax.f32 %v990, 0.0
      %v1041 = vmax.f32 %v993, 0.0
      %v1042 = vmax.f32 %v998, 0.0
      %v1043 = vmax.f32 %v1001, 0.0
      %v1044 = vmax.f32 %v1006, 0.0
      %v1045 = vmax.f32 %v1009, 0.0
      %v1046 = vmax.f32 %v1014, 0.0
      %v1047 = vmax.f32 %v1017, 0.0
      %v1048 = vmax.f32 %v1022, 0.0
      %v1049 = vmax.f32 %v1025, 0.0
      %v1050 = vmax.f32 %v1030, 0.0
      %v1051 = vmax.f32 %v1033, 0.0
      %v1052 = vpack.c.bf16 %v1037, %v1036
      %v1053 = vpack.c.bf16 %v1039, %v1038
      %v1054 = vpack.c.bf16 %v1041, %v1040
      %v1055 = vpack.c.bf16 %v1043, %v1042
      %v1056 = vpack.c.bf16 %v1045, %v1044
      %v1057 = vpack.c.bf16 %v1047, %v1046
      %v1058 = vpack.c.bf16 %v1049, %v1048
      %v1059 = vpack.c.bf16 %v1051, %v1050
      %s1060 = scalar_lea.vmem %s3, 96
      %v1061 = vld [vmem:[%s1060] sm:$0xf]
      %v1062 = vld [vmem:[%s1060 + $0x4] sm:$0xf]
      %v1063 = vld [vmem:[%s1060 + $0x8] sm:$0xf]
      %v1064 = vld [vmem:[%s1060 + $0xc] sm:$0xf]
      %v1065 = vld [vmem:[%s1060 + $0x10] sm:$0xf]
      %v1066 = vld [vmem:[%s1060 + $0x14] sm:$0xf]
      %v1067 = vld [vmem:[%s1060 + $0x18] sm:$0xf]
      %v1068 = vld [vmem:[%s1060 + $0x1c] sm:$0xf]
      %s1069 = scalar_lea.vmem %s4, 3
      %v1070 = vld [vmem:[%s1069] sm:$0x1]
      %v1072 = vlaneseq
      %v1073 = vshrl.u32 %v1072, 7
      %v1074 = vsub.s32 0, %v1073
      %v1075 = vrot.slane %v1070, %v1074
      %v1085 = vunpack.c.l.b16 %v1061
      %v1086 = vunpack.c.l.b16 %v1062
      %v1087 = vunpack.c.l.b16 %v1063
      %v1088 = vunpack.c.l.b16 %v1064
      %v1089 = vunpack.c.l.b16 %v1065
      %v1090 = vunpack.c.l.b16 %v1066
      %v1091 = vunpack.c.l.b16 %v1067
      %v1092 = vunpack.c.l.b16 %v1068
      %v1093 = vpack.c.b16 %v1086, %v1085
      %v1094 = vpack.c.b16 %v1088, %v1087
      %v1095 = vpack.c.b16 %v1090, %v1089
      %v1096 = vpack.c.b16 %v1092, %v1091
      %v1102 = vsel %vm542, %v1052, 0
      %v1105 = vsel %vm542, %v1053, 0
      %v1108 = vsel %vm542, %v1054, 0
      %v1111 = vsel %vm542, %v1055, 0
      %v1114 = vsel %vm542, %v1056, 0
      %v1117 = vsel %vm542, %v1057, 0
      %v1120 = vsel %vm542, %v1058, 0
      %v1123 = vsel %vm542, %v1059, 0
      %1125 = vmatprep.subr.bf16.mxu0 0
      %1126 = vmatpush1.bf16.msra.mxu0 %v1093
      %1127 = vmatprep.subr.bf16.mxu0 0
      %1128 = vmatpush1.bf16.msra.mxu0 %v1094
      %1129 = vmatprep.subr.bf16.mxu0 0
      %1130 = vmatpush1.bf16.msra.mxu0 %v1095
      %1131 = vmatprep.subr.bf16.mxu0 0
      %1132 = vmatpush1.bf16.msra.mxu0 %v1096
      %1133 = vmatprep.subr.bf16.mxu0 0
      %1134 = vmatpush1.bf16.msra.mxu0 0
      %1135 = vmatprep.subr.bf16.mxu0 0
      %1136 = vmatpush1.bf16.msra.mxu0 0
      %1137 = vmatprep.subr.bf16.mxu0 0
      %1138 = vmatpush1.bf16.msra.mxu0 0
      %1139 = vmatprep.subr.bf16.mxu0 0
      %1140 = vmatpush1.bf16.msra.mxu0 0
      %1141 = vmatprep.subr.bf16.mxu0 0
      %1142 = vmatpush1.bf16.msra.mxu0 0
      %1143 = vmatprep.subr.bf16.mxu0 0
      %1144 = vmatpush1.bf16.msra.mxu0 0
      %1145 = vmatprep.subr.bf16.mxu0 0
      %1146 = vmatpush1.bf16.msra.mxu0 0
      %1147 = vmatprep.subr.bf16.mxu0 0
      %1148 = vmatpush1.bf16.msra.mxu0 0
      %1149 = vmatprep.subr.bf16.mxu0 0
      %1150 = vmatpush1.bf16.msra.mxu0 0
      %1151 = vmatprep.subr.bf16.mxu0 0
      %1152 = vmatpush1.bf16.msra.mxu0 0
      %1153 = vmatprep.subr.bf16.mxu0 0
      %1154 = vmatpush1.bf16.msra.mxu0 0
      %1155 = vmatprep.subr.bf16.mxu0 0
      %1156 = vmatpush1.bf16.msra.mxu0 0
      %1157 = vmatprep.mubr.bf16.mxu0 0
      %1158 = vmatmul.mubr.bf16.gmra.mrb[0].mxu0 %v1102
      %v1159 = vpop.f32.mrb[0].mxu0
      %v1160 = vadd.f32 %v1075, %v1159
      %v1161 = vpop.f32.mrb[0].mxu0
      %v1162 = vpop.f32.mrb[0].mxu0
      %v1163 = vadd.f32 %v1075, %v1162
      %v1164 = vpop.f32.mrb[0].mxu0
      %1165 = vmatprep.mubr.bf16.mxu0 0
      %1166 = vmatmul.mubr.bf16.gmra.mrb[0].mxu0 %v1105
      %v1167 = vpop.f32.mrb[0].mxu0
      %v1168 = vadd.f32 %v1075, %v1167
      %v1169 = vpop.f32.mrb[0].mxu0
      %v1170 = vpop.f32.mrb[0].mxu0
      %v1171 = vadd.f32 %v1075, %v1170
      %v1172 = vpop.f32.mrb[0].mxu0
      %1173 = vmatprep.mubr.bf16.mxu0 0
      %1174 = vmatmul.mubr.bf16.gmra.mrb[0].mxu0 %v1108
      %v1175 = vpop.f32.mrb[0].mxu0
      %v1176 = vadd.f32 %v1075, %v1175
      %v1177 = vpop.f32.mrb[0].mxu0
      %v1178 = vpop.f32.mrb[0].mxu0
      %v1179 = vadd.f32 %v1075, %v1178
      %v1180 = vpop.f32.mrb[0].mxu0
      %1181 = vmatprep.mubr.bf16.mxu0 0
      %1182 = vmatmul.mubr.bf16.gmra.mrb[0].mxu0 %v1111
      %v1183 = vpop.f32.mrb[0].mxu0
      %v1184 = vadd.f32 %v1075, %v1183
      %v1185 = vpop.f32.mrb[0].mxu0
      %v1186 = vpop.f32.mrb[0].mxu0
      %v1187 = vadd.f32 %v1075, %v1186
      %v1188 = vpop.f32.mrb[0].mxu0
      %1189 = vmatprep.mubr.bf16.mxu0 0
      %1190 = vmatmul.mubr.bf16.gmra.mrb[0].mxu0 %v1114
      %v1191 = vpop.f32.mrb[0].mxu0
      %v1192 = vadd.f32 %v1075, %v1191
      %v1193 = vpop.f32.mrb[0].mxu0
      %v1194 = vpop.f32.mrb[0].mxu0
      %v1195 = vadd.f32 %v1075, %v1194
      %v1196 = vpop.f32.mrb[0].mxu0
      %1197 = vmatprep.mubr.bf16.mxu0 0
      %1198 = vmatmul.mubr.bf16.gmra.mrb[0].mxu0 %v1117
      %v1199 = vpop.f32.mrb[0].mxu0
      %v1200 = vadd.f32 %v1075, %v1199
      %v1201 = vpop.f32.mrb[0].mxu0
      %v1202 = vpop.f32.mrb[0].mxu0
      %v1203 = vadd.f32 %v1075, %v1202
      %v1204 = vpop.f32.mrb[0].mxu0
      %1205 = vmatprep.mubr.bf16.mxu0 0
      %1206 = vmatmul.mubr.bf16.gmra.mrb[0].mxu0 %v1120
      %v1207 = vpop.f32.mrb[0].mxu0
      %v1208 = vadd.f32 %v1075, %v1207
      %v1209 = vpop.f32.mrb[0].mxu0
      %v1210 = vpop.f32.mrb[0].mxu0
      %v1211 = vadd.f32 %v1075, %v1210
      %v1212 = vpop.f32.mrb[0].mxu0
      %1213 = vmatprep.mubr.bf16.mxu0 0
      %1214 = vmatmul.mubr.bf16.gmra.mrb[0].mxu0 %v1123
      %v1215 = vpop.f32.mrb[0].mxu0
      %v1216 = vadd.f32 %v1075, %v1215
      %v1217 = vpop.f32.mrb[0].mxu0
      %v1218 = vpop.f32.mrb[0].mxu0
      %v1219 = vadd.f32 %v1075, %v1218
      %v1220 = vpop.f32.mrb[0].mxu0
      %1221 = vdwg.mxu0
      %v1222 = vmax.f32 %v1160, 0.0
      %v1223 = vmax.f32 %v1163, 0.0
      %v1224 = vmax.f32 %v1168, 0.0
      %v1225 = vmax.f32 %v1171, 0.0
      %v1226 = vmax.f32 %v1176, 0.0
      %v1227 = vmax.f32 %v1179, 0.0
      %v1228 = vmax.f32 %v1184, 0.0
      %v1229 = vmax.f32 %v1187, 0.0
      %v1230 = vmax.f32 %v1192, 0.0
      %v1231 = vmax.f32 %v1195, 0.0
      %v1232 = vmax.f32 %v1200, 0.0
      %v1233 = vmax.f32 %v1203, 0.0
      %v1234 = vmax.f32 %v1208, 0.0
      %v1235 = vmax.f32 %v1211, 0.0
      %v1236 = vmax.f32 %v1216, 0.0
      %v1237 = vmax.f32 %v1219, 0.0
      %v1238 = vpack.c.bf16 %v1223, %v1222
      %v1239 = vpack.c.bf16 %v1225, %v1224
      %v1240 = vpack.c.bf16 %v1227, %v1226
      %v1241 = vpack.c.bf16 %v1229, %v1228
      %v1242 = vpack.c.bf16 %v1231, %v1230
      %v1243 = vpack.c.bf16 %v1233, %v1232
      %v1244 = vpack.c.bf16 %v1235, %v1234
      %v1245 = vpack.c.bf16 %v1237, %v1236
      %s1246 = scalar_lea.vmem %s3, 128
      %v1247 = vld [vmem:[%s1246] sm:$0xf]
      %v1248 = vld [vmem:[%s1246 + $0x4] sm:$0xf]
      %v1249 = vld [vmem:[%s1246 + $0x8] sm:$0xf]
      %v1250 = vld [vmem:[%s1246 + $0xc] sm:$0xf]
      %v1251 = vld [vmem:[%s1246 + $0x10] sm:$0xf]
      %v1252 = vld [vmem:[%s1246 + $0x14] sm:$0xf]
      %v1253 = vld [vmem:[%s1246 + $0x18] sm:$0xf]
      %v1254 = vld [vmem:[%s1246 + $0x1c] sm:$0xf]
      %s1255 = scalar_lea.vmem %s4, 4
      %v1256 = vld [vmem:[%s1255] sm:$0x1]
      %v1258 = vlaneseq
      %v1259 = vshrl.u32 %v1258, 7
      %v1260 = vsub.s32 0, %v1259
      %v1261 = vrot.slane %v1256, %v1260
      %v1271 = vunpack.c.l.b16 %v1247
      %v1272 = vunpack.c.l.b16 %v1248
      %v1273 = vunpack.c.l.b16 %v1249
      %v1274 = vunpack.c.l.b16 %v1250
      %v1275 = vunpack.c.l.b16 %v1251
      %v1276 = vunpack.c.l.b16 %v1252
      %v1277 = vunpack.c.l.b16 %v1253
      %v1278 = vunpack.c.l.b16 %v1254
      %v1279 = vpack.c.b16 %v1272, %v1271
      %v1280 = vpack.c.b16 %v1274, %v1273
      %v1281 = vpack.c.b16 %v1276, %v1275
      %v1282 = vpack.c.b16 %v1278, %v1277
      %v1288 = vsel %vm542, %v1238, 0
      %v1291 = vsel %vm542, %v1239, 0
      %v1294 = vsel %vm542, %v1240, 0
      %v1297 = vsel %vm542, %v1241, 0
      %v1300 = vsel %vm542, %v1242, 0
      %v1303 = vsel %vm542, %v1243, 0
      %v1306 = vsel %vm542, %v1244, 0
      %v1309 = vsel %vm542, %v1245, 0
      %1311 = vmatprep.subr.bf16.mxu0 0
      %1312 = vmatpush1.bf16.msra.mxu0 %v1279
      %1313 = vmatprep.subr.bf16.mxu0 0
      %1314 = vmatpush1.bf16.msra.mxu0 %v1280
      %1315 = vmatprep.subr.bf16.mxu0 0
      %1316 = vmatpush1.bf16.msra.mxu0 %v1281
      %1317 = vmatprep.subr.bf16.mxu0 0
      %1318 = vmatpush1.bf16.msra.mxu0 %v1282
      %1319 = vmatprep.subr.bf16.mxu0 0
      %1320 = vmatpush1.bf16.msra.mxu0 0
      %1321 = vmatprep.subr.bf16.mxu0 0
      %1322 = vmatpush1.bf16.msra.mxu0 0
      %1323 = vmatprep.subr.bf16.mxu0 0
      %1324 = vmatpush1.bf16.msra.mxu0 0
      %1325 = vmatprep.subr.bf16.mxu0 0
      %1326 = vmatpush1.bf16.msra.mxu0 0
      %1327 = vmatprep.subr.bf16.mxu0 0
      %1328 = vmatpush1.bf16.msra.mxu0 0
      %1329 = vmatprep.subr.bf16.mxu0 0
      %1330 = vmatpush1.bf16.msra.mxu0 0
      %1331 = vmatprep.subr.bf16.mxu0 0
      %1332 = vmatpush1.bf16.msra.mxu0 0
      %1333 = vmatprep.subr.bf16.mxu0 0
      %1334 = vmatpush1.bf16.msra.mxu0 0
      %1335 = vmatprep.subr.bf16.mxu0 0
      %1336 = vmatpush1.bf16.msra.mxu0 0
      %1337 = vmatprep.subr.bf16.mxu0 0
      %1338 = vmatpush1.bf16.msra.mxu0 0
      %1339 = vmatprep.subr.bf16.mxu0 0
      %1340 = vmatpush1.bf16.msra.mxu0 0
      %1341 = vmatprep.subr.bf16.mxu0 0
      %1342 = vmatpush1.bf16.msra.mxu0 0
      %1343 = vmatprep.mubr.bf16.mxu0 0
      %1344 = vmatmul.mubr.bf16.gmra.mrb[0].mxu0 %v1288
      %v1345 = vpop.f32.mrb[0].mxu0
      %v1346 = vadd.f32 %v1261, %v1345
      %v1347 = vpop.f32.mrb[0].mxu0
      %v1348 = vpop.f32.mrb[0].mxu0
      %v1349 = vadd.f32 %v1261, %v1348
      %v1350 = vpop.f32.mrb[0].mxu0
      %1351 = vmatprep.mubr.bf16.mxu0 0
      %1352 = vmatmul.mubr.bf16.gmra.mrb[0].mxu0 %v1291
      %v1353 = vpop.f32.mrb[0].mxu0
      %v1354 = vadd.f32 %v1261, %v1353
      %v1355 = vpop.f32.mrb[0].mxu0
      %v1356 = vpop.f32.mrb[0].mxu0
      %v1357 = vadd.f32 %v1261, %v1356
      %v1358 = vpop.f32.mrb[0].mxu0
      %1359 = vmatprep.mubr.bf16.mxu0 0
      %1360 = vmatmul.mubr.bf16.gmra.mrb[0].mxu0 %v1294
      %v1361 = vpop.f32.mrb[0].mxu0
      %v1362 = vadd.f32 %v1261, %v1361
      %v1363 = vpop.f32.mrb[0].mxu0
      %v1364 = vpop.f32.mrb[0].mxu0
      %v1365 = vadd.f32 %v1261, %v1364
      %v1366 = vpop.f32.mrb[0].mxu0
      %1367 = vmatprep.mubr.bf16.mxu0 0
      %1368 = vmatmul.mubr.bf16.gmra.mrb[0].mxu0 %v1297
      %v1369 = vpop.f32.mrb[0].mxu0
      %v1370 = vadd.f32 %v1261, %v1369
      %v1371 = vpop.f32.mrb[0].mxu0
      %v1372 = vpop.f32.mrb[0].mxu0
      %v1373 = vadd.f32 %v1261, %v1372
      %v1374 = vpop.f32.mrb[0].mxu0
      %1375 = vmatprep.mubr.bf16.mxu0 0
      %1376 = vmatmul.mubr.bf16.gmra.mrb[0].mxu0 %v1300
      %v1377 = vpop.f32.mrb[0].mxu0
      %v1378 = vadd.f32 %v1261, %v1377
      %v1379 = vpop.f32.mrb[0].mxu0
      %v1380 = vpop.f32.mrb[0].mxu0
      %v1381 = vadd.f32 %v1261, %v1380
      %v1382 = vpop.f32.mrb[0].mxu0
      %1383 = vmatprep.mubr.bf16.mxu0 0
      %1384 = vmatmul.mubr.bf16.gmra.mrb[0].mxu0 %v1303
      %v1385 = vpop.f32.mrb[0].mxu0
      %v1386 = vadd.f32 %v1261, %v1385
      %v1387 = vpop.f32.mrb[0].mxu0
      %v1388 = vpop.f32.mrb[0].mxu0
      %v1389 = vadd.f32 %v1261, %v1388
      %v1390 = vpop.f32.mrb[0].mxu0
      %1391 = vmatprep.mubr.bf16.mxu0 0
      %1392 = vmatmul.mubr.bf16.gmra.mrb[0].mxu0 %v1306
      %v1393 = vpop.f32.mrb[0].mxu0
      %v1394 = vadd.f32 %v1261, %v1393
      %v1395 = vpop.f32.mrb[0].mxu0
      %v1396 = vpop.f32.mrb[0].mxu0
      %v1397 = vadd.f32 %v1261, %v1396
      %v1398 = vpop.f32.mrb[0].mxu0
      %1399 = vmatprep.mubr.bf16.mxu0 0
      %1400 = vmatmul.mubr.bf16.gmra.mrb[0].mxu0 %v1309
      %v1401 = vpop.f32.mrb[0].mxu0
      %v1402 = vadd.f32 %v1261, %v1401
      %v1403 = vpop.f32.mrb[0].mxu0
      %v1404 = vpop.f32.mrb[0].mxu0
      %v1405 = vadd.f32 %v1261, %v1404
      %v1406 = vpop.f32.mrb[0].mxu0
      %1407 = vdwg.mxu0
      %v1408 = vmax.f32 %v1346, 0.0
      %v1409 = vmax.f32 %v1349, 0.0
      %v1410 = vmax.f32 %v1354, 0.0
      %v1411 = vmax.f32 %v1357, 0.0
      %v1412 = vmax.f32 %v1362, 0.0
      %v1413 = vmax.f32 %v1365, 0.0
      %v1414 = vmax.f32 %v1370, 0.0
      %v1415 = vmax.f32 %v1373, 0.0
      %v1416 = vmax.f32 %v1378, 0.0
      %v1417 = vmax.f32 %v1381, 0.0
      %v1418 = vmax.f32 %v1386, 0.0
      %v1419 = vmax.f32 %v1389, 0.0
      %v1420 = vmax.f32 %v1394, 0.0
      %v1421 = vmax.f32 %v1397, 0.0
      %v1422 = vmax.f32 %v1402, 0.0
      %v1423 = vmax.f32 %v1405, 0.0
      %v1424 = vpack.c.bf16 %v1409, %v1408
      %v1425 = vpack.c.bf16 %v1411, %v1410
      %v1426 = vpack.c.bf16 %v1413, %v1412
      %v1427 = vpack.c.bf16 %v1415, %v1414
      %v1428 = vpack.c.bf16 %v1417, %v1416
      %v1429 = vpack.c.bf16 %v1419, %v1418
      %v1430 = vpack.c.bf16 %v1421, %v1420
      %v1431 = vpack.c.bf16 %v1423, %v1422
      %s1432 = scalar_lea.vmem %s3, 160
      %v1433 = vld [vmem:[%s1432] sm:$0xf]
      %v1434 = vld [vmem:[%s1432 + $0x4] sm:$0xf]
      %v1435 = vld [vmem:[%s1432 + $0x8] sm:$0xf]
      %v1436 = vld [vmem:[%s1432 + $0xc] sm:$0xf]
      %v1437 = vld [vmem:[%s1432 + $0x10] sm:$0xf]
      %v1438 = vld [vmem:[%s1432 + $0x14] sm:$0xf]
      %v1439 = vld [vmem:[%s1432 + $0x18] sm:$0xf]
      %v1440 = vld [vmem:[%s1432 + $0x1c] sm:$0xf]
      %s1441 = scalar_lea.vmem %s4, 5
      %v1442 = vld [vmem:[%s1441] sm:$0x1]
      %v1444 = vlaneseq
      %v1445 = vshrl.u32 %v1444, 7
      %v1446 = vsub.s32 0, %v1445
      %v1447 = vrot.slane %v1442, %v1446
      %v1457 = vunpack.c.l.b16 %v1433
      %v1458 = vunpack.c.l.b16 %v1434
      %v1459 = vunpack.c.l.b16 %v1435
      %v1460 = vunpack.c.l.b16 %v1436
      %v1461 = vunpack.c.l.b16 %v1437
      %v1462 = vunpack.c.l.b16 %v1438
      %v1463 = vunpack.c.l.b16 %v1439
      %v1464 = vunpack.c.l.b16 %v1440
      %v1465 = vpack.c.b16 %v1458, %v1457
      %v1466 = vpack.c.b16 %v1460, %v1459
      %v1467 = vpack.c.b16 %v1462, %v1461
      %v1468 = vpack.c.b16 %v1464, %v1463
      %v1474 = vsel %vm542, %v1424, 0
      %v1477 = vsel %vm542, %v1425, 0
      %v1480 = vsel %vm542, %v1426, 0
      %v1483 = vsel %vm542, %v1427, 0
      %v1486 = vsel %vm542, %v1428, 0
      %v1489 = vsel %vm542, %v1429, 0
      %v1492 = vsel %vm542, %v1430, 0
      %v1495 = vsel %vm542, %v1431, 0
      %1497 = vmatprep.subr.bf16.mxu0 0
      %1498 = vmatpush1.bf16.msra.mxu0 %v1465
      %1499 = vmatprep.subr.bf16.mxu0 0
      %1500 = vmatpush1.bf16.msra.mxu0 %v1466
      %1501 = vmatprep.subr.bf16.mxu0 0
      %1502 = vmatpush1.bf16.msra.mxu0 %v1467
      %1503 = vmatprep.subr.bf16.mxu0 0
      %1504 = vmatpush1.bf16.msra.mxu0 %v1468
      %1505 = vmatprep.subr.bf16.mxu0 0
      %1506 = vmatpush1.bf16.msra.mxu0 0
      %1507 = vmatprep.subr.bf16.mxu0 0
      %1508 = vmatpush1.bf16.msra.mxu0 0
      %1509 = vmatprep.subr.bf16.mxu0 0
      %1510 = vmatpush1.bf16.msra.mxu0 0
      %1511 = vmatprep.subr.bf16.mxu0 0
      %1512 = vmatpush1.bf16.msra.mxu0 0
      %1513 = vmatprep.subr.bf16.mxu0 0
      %1514 = vmatpush1.bf16.msra.mxu0 0
      %1515 = vmatprep.subr.bf16.mxu0 0
      %1516 = vmatpush1.bf16.msra.mxu0 0
      %1517 = vmatprep.subr.bf16.mxu0 0
      %1518 = vmatpush1.bf16.msra.mxu0 0
      %1519 = vmatprep.subr.bf16.mxu0 0
      %1520 = vmatpush1.bf16.msra.mxu0 0
      %1521 = vmatprep.subr.bf16.mxu0 0
      %1522 = vmatpush1.bf16.msra.mxu0 0
      %1523 = vmatprep.subr.bf16.mxu0 0
      %1524 = vmatpush1.bf16.msra.mxu0 0
      %1525 = vmatprep.subr.bf16.mxu0 0
      %1526 = vmatpush1.bf16.msra.mxu0 0
      %1527 = vmatprep.subr.bf16.mxu0 0
      %1528 = vmatpush1.bf16.msra.mxu0 0
      %1529 = vmatprep.mubr.bf16.mxu0 0
      %1530 = vmatmul.mubr.bf16.gmra.mrb[0].mxu0 %v1474
      %v1531 = vpop.f32.mrb[0].mxu0
      %v1532 = vadd.f32 %v1447, %v1531
      %v1533 = vpop.f32.mrb[0].mxu0
      %v1534 = vpop.f32.mrb[0].mxu0
      %v1535 = vadd.f32 %v1447, %v1534
      %v1536 = vpop.f32.mrb[0].mxu0
      %1537 = vmatprep.mubr.bf16.mxu0 0
      %1538 = vmatmul.mubr.bf16.gmra.mrb[0].mxu0 %v1477
      %v1539 = vpop.f32.mrb[0].mxu0
      %v1540 = vadd.f32 %v1447, %v1539
      %v1541 = vpop.f32.mrb[0].mxu0
      %v1542 = vpop.f32.mrb[0].mxu0
      %v1543 = vadd.f32 %v1447, %v1542
      %v1544 = vpop.f32.mrb[0].mxu0
      %1545 = vmatprep.mubr.bf16.mxu0 0
      %1546 = vmatmul.mubr.bf16.gmra.mrb[0].mxu0 %v1480
      %v1547 = vpop.f32.mrb[0].mxu0
      %v1548 = vadd.f32 %v1447, %v1547
      %v1549 = vpop.f32.mrb[0].mxu0
      %v1550 = vpop.f32.mrb[0].mxu0
      %v1551 = vadd.f32 %v1447, %v1550
      %v1552 = vpop.f32.mrb[0].mxu0
      %1553 = vmatprep.mubr.bf16.mxu0 0
      %1554 = vmatmul.mubr.bf16.gmra.mrb[0].mxu0 %v1483
      %v1555 = vpop.f32.mrb[0].mxu0
      %v1556 = vadd.f32 %v1447, %v1555
      %v1557 = vpop.f32.mrb[0].mxu0
      %v1558 = vpop.f32.mrb[0].mxu0
      %v1559 = vadd.f32 %v1447, %v1558
      %v1560 = vpop.f32.mrb[0].mxu0
      %1561 = vmatprep.mubr.bf16.mxu0 0
      %1562 = vmatmul.mubr.bf16.gmra.mrb[0].mxu0 %v1486
      %v1563 = vpop.f32.mrb[0].mxu0
      %v1564 = vadd.f32 %v1447, %v1563
      %v1565 = vpop.f32.mrb[0].mxu0
      %v1566 = vpop.f32.mrb[0].mxu0
      %v1567 = vadd.f32 %v1447, %v1566
      %v1568 = vpop.f32.mrb[0].mxu0
      %1569 = vmatprep.mubr.bf16.mxu0 0
      %1570 = vmatmul.mubr.bf16.gmra.mrb[0].mxu0 %v1489
      %v1571 = vpop.f32.mrb[0].mxu0
      %v1572 = vadd.f32 %v1447, %v1571
      %v1573 = vpop.f32.mrb[0].mxu0
      %v1574 = vpop.f32.mrb[0].mxu0
      %v1575 = vadd.f32 %v1447, %v1574
      %v1576 = vpop.f32.mrb[0].mxu0
      %1577 = vmatprep.mubr.bf16.mxu0 0
      %1578 = vmatmul.mubr.bf16.gmra.mrb[0].mxu0 %v1492
      %v1579 = vpop.f32.mrb[0].mxu0
      %v1580 = vadd.f32 %v1447, %v1579
      %v1581 = vpop.f32.mrb[0].mxu0
      %v1582 = vpop.f32.mrb[0].mxu0
      %v1583 = vadd.f32 %v1447, %v1582
      %v1584 = vpop.f32.mrb[0].mxu0
      %1585 = vmatprep.mubr.bf16.mxu0 0
      %1586 = vmatmul.mubr.bf16.gmra.mrb[0].mxu0 %v1495
      %v1587 = vpop.f32.mrb[0].mxu0
      %v1588 = vadd.f32 %v1447, %v1587
      %v1589 = vpop.f32.mrb[0].mxu0
      %v1590 = vpop.f32.mrb[0].mxu0
      %v1591 = vadd.f32 %v1447, %v1590
      %v1592 = vpop.f32.mrb[0].mxu0
      %1593 = vdwg.mxu0
      %v1594 = vmax.f32 %v1532, 0.0
      %v1595 = vmax.f32 %v1535, 0.0
      %v1596 = vmax.f32 %v1540, 0.0
      %v1597 = vmax.f32 %v1543, 0.0
      %v1598 = vmax.f32 %v1548, 0.0
      %v1599 = vmax.f32 %v1551, 0.0
      %v1600 = vmax.f32 %v1556, 0.0
      %v1601 = vmax.f32 %v1559, 0.0
      %v1602 = vmax.f32 %v1564, 0.0
      %v1603 = vmax.f32 %v1567, 0.0
      %v1604 = vmax.f32 %v1572, 0.0
      %v1605 = vmax.f32 %v1575, 0.0
      %v1606 = vmax.f32 %v1580, 0.0
      %v1607 = vmax.f32 %v1583, 0.0
      %v1608 = vmax.f32 %v1588, 0.0
      %v1609 = vmax.f32 %v1591, 0.0
      %v1610 = vpack.c.bf16 %v1595, %v1594
      %v1611 = vpack.c.bf16 %v1597, %v1596
      %v1612 = vpack.c.bf16 %v1599, %v1598
      %v1613 = vpack.c.bf16 %v1601, %v1600
      %v1614 = vpack.c.bf16 %v1603, %v1602
      %v1615 = vpack.c.bf16 %v1605, %v1604
      %v1616 = vpack.c.bf16 %v1607, %v1606
      %v1617 = vpack.c.bf16 %v1609, %v1608
      %v1618 = vld [vmem:[%s5] sm:$0xff]
      %v1619 = vld [vmem:[%s5 + $0x8] sm:$0xff]
      %v1620 = vld [vmem:[%s5 + $0x10] sm:$0xff]
      %v1621 = vld [vmem:[%s5 + $0x18] sm:$0xff]
      %v1622 = vld [vmem:[%s5 + $0x20] sm:$0xff]
      %v1623 = vld [vmem:[%s5 + $0x28] sm:$0xff]
      %v1624 = vld [vmem:[%s5 + $0x30] sm:$0xff]
      %v1625 = vld [vmem:[%s5 + $0x38] sm:$0xff]
      %v1626 = vld [vmem:[%s6] sm:$0x3]
      %v1628 = vlaneseq
      %v1629 = vshrl.u32 %v1628, 7
      %v1630 = vsub.s32 0, %v1629
      %v1631 = vrot.slane %v1626, %v1630
      %v1632 = vlaneseq
      %v1633 = vshrl.u32 %v1632, 7
      %v1634 = vsub.s32 1, %v1633
      %v1635 = vrot.slane %v1626, %v1634
      %v1646 = vunpack.c.l.b16 %v1618
      %v1647 = vunpack.c.h.b16 %v1618
      %v1648 = vunpack.c.l.b16 %v1619
      %v1649 = vunpack.c.h.b16 %v1619
      %v1650 = vunpack.c.l.b16 %v1620
      %v1651 = vunpack.c.h.b16 %v1620
      %v1652 = vunpack.c.l.b16 %v1621
      %v1653 = vunpack.c.h.b16 %v1621
      %v1654 = vunpack.c.l.b16 %v1622
      %v1655 = vunpack.c.h.b16 %v1622
      %v1656 = vunpack.c.l.b16 %v1623
      %v1657 = vunpack.c.h.b16 %v1623
      %v1658 = vunpack.c.l.b16 %v1624
      %v1659 = vunpack.c.h.b16 %v1624
      %v1660 = vunpack.c.l.b16 %v1625
      %v1661 = vunpack.c.h.b16 %v1625
      %v1662 = vpack.c.b16 %v1648, %v1646
      %v1663 = vpack.c.b16 %v1649, %v1647
      %v1664 = vpack.c.b16 %v1652, %v1650
      %v1665 = vpack.c.b16 %v1653, %v1651
      %v1666 = vpack.c.b16 %v1656, %v1654
      %v1667 = vpack.c.b16 %v1657, %v1655
      %v1668 = vpack.c.b16 %v1660, %v1658
      %v1669 = vpack.c.b16 %v1661, %v1659
      %v1679 = vsel %vm542, %v1610, 0
      %v1682 = vsel %vm542, %v1611, 0
      %v1685 = vsel %vm542, %v1612, 0
      %v1688 = vsel %vm542, %v1613, 0
      %v1691 = vsel %vm542, %v1614, 0
      %v1694 = vsel %vm542, %v1615, 0
      %v1697 = vsel %vm542, %v1616, 0
      %v1700 = vsel %vm542, %v1617, 0
      %1702 = vmatprep.subr.bf16.mxu0 %v1663
      %1703 = vmatpush1.bf16.msra.mxu0 %v1662
      %1704 = vmatprep.subr.bf16.mxu0 %v1665
      %1705 = vmatpush1.bf16.msra.mxu0 %v1664
      %1706 = vmatprep.subr.bf16.mxu0 %v1667
      %1707 = vmatpush1.bf16.msra.mxu0 %v1666
      %1708 = vmatprep.subr.bf16.mxu0 %v1669
      %1709 = vmatpush1.bf16.msra.mxu0 %v1668
      %1710 = vmatprep.subr.bf16.mxu0 0
      %1711 = vmatpush1.bf16.msra.mxu0 0
      %1712 = vmatprep.subr.bf16.mxu0 0
      %1713 = vmatpush1.bf16.msra.mxu0 0
      %1714 = vmatprep.subr.bf16.mxu0 0
      %1715 = vmatpush1.bf16.msra.mxu0 0
      %1716 = vmatprep.subr.bf16.mxu0 0
      %1717 = vmatpush1.bf16.msra.mxu0 0
      %1718 = vmatprep.subr.bf16.mxu0 0
      %1719 = vmatpush1.bf16.msra.mxu0 0
      %1720 = vmatprep.subr.bf16.mxu0 0
      %1721 = vmatpush1.bf16.msra.mxu0 0
      %1722 = vmatprep.subr.bf16.mxu0 0
      %1723 = vmatpush1.bf16.msra.mxu0 0
      %1724 = vmatprep.subr.bf16.mxu0 0
      %1725 = vmatpush1.bf16.msra.mxu0 0
      %1726 = vmatprep.subr.bf16.mxu0 0
      %1727 = vmatpush1.bf16.msra.mxu0 0
      %1728 = vmatprep.subr.bf16.mxu0 0
      %1729 = vmatpush1.bf16.msra.mxu0 0
      %1730 = vmatprep.subr.bf16.mxu0 0
      %1731 = vmatpush1.bf16.msra.mxu0 0
      %1732 = vmatprep.subr.bf16.mxu0 0
      %1733 = vmatpush1.bf16.msra.mxu0 0
      %1734 = vmatprep.mubr.bf16.mxu0 0
      %1735 = vmatmul.mubr.bf16.gmra.mrb[0].mxu0 %v1679
      %v1736 = vpop.f32.mrb[0].mxu0
      %v1737 = vadd.f32 %v1631, %v1736
      %v1738 = vpop.f32.mrb[0].mxu0
      %v1739 = vadd.f32 %v1635, %v1738
      %v1740 = vpop.f32.mrb[0].mxu0
      %v1741 = vadd.f32 %v1631, %v1740
      %v1742 = vpop.f32.mrb[0].mxu0
      %v1743 = vadd.f32 %v1635, %v1742
      %1744 = vmatprep.mubr.bf16.mxu0 0
      %1745 = vmatmul.mubr.bf16.gmra.mrb[0].mxu0 %v1682
      %v1746 = vpop.f32.mrb[0].mxu0
      %v1747 = vadd.f32 %v1631, %v1746
      %v1748 = vpop.f32.mrb[0].mxu0
      %v1749 = vadd.f32 %v1635, %v1748
      %v1750 = vpop.f32.mrb[0].mxu0
      %v1751 = vadd.f32 %v1631, %v1750
      %v1752 = vpop.f32.mrb[0].mxu0
      %v1753 = vadd.f32 %v1635, %v1752
      %1754 = vmatprep.mubr.bf16.mxu0 0
      %1755 = vmatmul.mubr.bf16.gmra.mrb[0].mxu0 %v1685
      %v1756 = vpop.f32.mrb[0].mxu0
      %v1757 = vadd.f32 %v1631, %v1756
      %v1758 = vpop.f32.mrb[0].mxu0
      %v1759 = vadd.f32 %v1635, %v1758
      %v1760 = vpop.f32.mrb[0].mxu0
      %v1761 = vadd.f32 %v1631, %v1760
      %v1762 = vpop.f32.mrb[0].mxu0
      %v1763 = vadd.f32 %v1635, %v1762
      %1764 = vmatprep.mubr.bf16.mxu0 0
      %1765 = vmatmul.mubr.bf16.gmra.mrb[0].mxu0 %v1688
      %v1766 = vpop.f32.mrb[0].mxu0
      %v1767 = vadd.f32 %v1631, %v1766
      %v1768 = vpop.f32.mrb[0].mxu0
      %v1769 = vadd.f32 %v1635, %v1768
      %v1770 = vpop.f32.mrb[0].mxu0
      %v1771 = vadd.f32 %v1631, %v1770
      %v1772 = vpop.f32.mrb[0].mxu0
      %v1773 = vadd.f32 %v1635, %v1772
      %1774 = vmatprep.mubr.bf16.mxu0 0
      %1775 = vmatmul.mubr.bf16.gmra.mrb[0].mxu0 %v1691
      %v1776 = vpop.f32.mrb[0].mxu0
      %v1777 = vadd.f32 %v1631, %v1776
      %v1778 = vpop.f32.mrb[0].mxu0
      %v1779 = vadd.f32 %v1635, %v1778
      %v1780 = vpop.f32.mrb[0].mxu0
      %v1781 = vadd.f32 %v1631, %v1780
      %v1782 = vpop.f32.mrb[0].mxu0
      %v1783 = vadd.f32 %v1635, %v1782
      %1784 = vmatprep.mubr.bf16.mxu0 0
      %1785 = vmatmul.mubr.bf16.gmra.mrb[0].mxu0 %v1694
      %v1786 = vpop.f32.mrb[0].mxu0
      %v1787 = vadd.f32 %v1631, %v1786
      %v1788 = vpop.f32.mrb[0].mxu0
      %v1789 = vadd.f32 %v1635, %v1788
      %v1790 = vpop.f32.mrb[0].mxu0
      %v1791 = vadd.f32 %v1631, %v1790
      %v1792 = vpop.f32.mrb[0].mxu0
      %v1793 = vadd.f32 %v1635, %v1792
      %1794 = vmatprep.mubr.bf16.mxu0 0
      %1795 = vmatmul.mubr.bf16.gmra.mrb[0].mxu0 %v1697
      %v1796 = vpop.f32.mrb[0].mxu0
      %v1797 = vadd.f32 %v1631, %v1796
      %v1798 = vpop.f32.mrb[0].mxu0
      %v1799 = vadd.f32 %v1635, %v1798
      %v1800 = vpop.f32.mrb[0].mxu0
      %v1801 = vadd.f32 %v1631, %v1800
      %v1802 = vpop.f32.mrb[0].mxu0
      %v1803 = vadd.f32 %v1635, %v1802
      %1804 = vmatprep.mubr.bf16.mxu0 0
      %1805 = vmatmul.mubr.bf16.gmra.mrb[0].mxu0 %v1700
      %v1806 = vpop.f32.mrb[0].mxu0
      %v1807 = vadd.f32 %v1631, %v1806
      %v1808 = vpop.f32.mrb[0].mxu0
      %v1809 = vadd.f32 %v1635, %v1808
      %v1810 = vpop.f32.mrb[0].mxu0
      %v1811 = vadd.f32 %v1631, %v1810
      %v1812 = vpop.f32.mrb[0].mxu0
      %v1813 = vadd.f32 %v1635, %v1812
      %1814 = vdwg.mxu0
      %1831 = vrot.lane.b32.xlu0 %v310, 32
      %v1832 = vpop.permute.xlu0 %1831
      %1833 = vrot.lane.b32.xlu0 %v311, 32
      %v1834 = vpop.permute.xlu0 %1833
      %1835 = vrot.lane.b32.xlu0 %v312, 32
      %v1836 = vpop.permute.xlu0 %1835
      %1837 = vrot.lane.b32.xlu0 %v313, 32
      %v1838 = vpop.permute.xlu0 %1837
      %1839 = vrot.lane.b32.xlu0 %v314, 32
      %v1840 = vpop.permute.xlu0 %1839
      %1841 = vrot.lane.b32.xlu0 %v315, 32
      %v1842 = vpop.permute.xlu0 %1841
      %1843 = vrot.lane.b32.xlu0 %v316, 32
      %v1844 = vpop.permute.xlu0 %1843
      %1845 = vrot.lane.b32.xlu0 %v317, 32
      %v1846 = vpop.permute.xlu0 %1845
      %1847 = vrot.lane.b32.xlu0 %v318, 32
      %v1848 = vpop.permute.xlu0 %1847
      %1849 = vrot.lane.b32.xlu0 %v319, 32
      %v1850 = vpop.permute.xlu0 %1849
      %1851 = vrot.lane.b32.xlu0 %v320, 32
      %v1852 = vpop.permute.xlu0 %1851
      %1853 = vrot.lane.b32.xlu0 %v321, 32
      %v1854 = vpop.permute.xlu0 %1853
      %1855 = vrot.lane.b32.xlu0 %v322, 32
      %v1856 = vpop.permute.xlu0 %1855
      %1857 = vrot.lane.b32.xlu0 %v323, 32
      %v1858 = vpop.permute.xlu0 %1857
      %1859 = vrot.lane.b32.xlu0 %v324, 32
      %v1860 = vpop.permute.xlu0 %1859
      %1861 = vrot.lane.b32.xlu0 %v325, 32
      %v1862 = vpop.permute.xlu0 %1861
      %1879 = vrot.lane.b32.xlu0 %v310, 64
      %v1880 = vpop.permute.xlu0 %1879
      %1881 = vrot.lane.b32.xlu0 %v311, 64
      %v1882 = vpop.permute.xlu0 %1881
      %1883 = vrot.lane.b32.xlu0 %v312, 64
      %v1884 = vpop.permute.xlu0 %1883
      %1885 = vrot.lane.b32.xlu0 %v313, 64
      %v1886 = vpop.permute.xlu0 %1885
      %1887 = vrot.lane.b32.xlu0 %v314, 64
      %v1888 = vpop.permute.xlu0 %1887
      %1889 = vrot.lane.b32.xlu0 %v315, 64
      %v1890 = vpop.permute.xlu0 %1889
      %1891 = vrot.lane.b32.xlu0 %v316, 64
      %v1892 = vpop.permute.xlu0 %1891
      %1893 = vrot.lane.b32.xlu0 %v317, 64
      %v1894 = vpop.permute.xlu0 %1893
      %1895 = vrot.lane.b32.xlu0 %v318, 64
      %v1896 = vpop.permute.xlu0 %1895
      %1897 = vrot.lane.b32.xlu0 %v319, 64
      %v1898 = vpop.permute.xlu0 %1897
      %1899 = vrot.lane.b32.xlu0 %v320, 64
      %v1900 = vpop.permute.xlu0 %1899
      %1901 = vrot.lane.b32.xlu0 %v321, 64
      %v1902 = vpop.permute.xlu0 %1901
      %1903 = vrot.lane.b32.xlu0 %v322, 64
      %v1904 = vpop.permute.xlu0 %1903
      %1905 = vrot.lane.b32.xlu0 %v323, 64
      %v1906 = vpop.permute.xlu0 %1905
      %1907 = vrot.lane.b32.xlu0 %v324, 64
      %v1908 = vpop.permute.xlu0 %1907
      %1909 = vrot.lane.b32.xlu0 %v325, 64
      %v1910 = vpop.permute.xlu0 %1909
      %1927 = vrot.lane.b32.xlu0 %v310, 96
      %v1928 = vpop.permute.xlu0 %1927
      %1929 = vrot.lane.b32.xlu0 %v311, 96
      %v1930 = vpop.permute.xlu0 %1929
      %1931 = vrot.lane.b32.xlu0 %v312, 96
      %v1932 = vpop.permute.xlu0 %1931
      %1933 = vrot.lane.b32.xlu0 %v313, 96
      %v1934 = vpop.permute.xlu0 %1933
      %1935 = vrot.lane.b32.xlu0 %v314, 96
      %v1936 = vpop.permute.xlu0 %1935
      %1937 = vrot.lane.b32.xlu0 %v315, 96
      %v1938 = vpop.permute.xlu0 %1937
      %1939 = vrot.lane.b32.xlu0 %v316, 96
      %v1940 = vpop.permute.xlu0 %1939
      %1941 = vrot.lane.b32.xlu0 %v317, 96
      %v1942 = vpop.permute.xlu0 %1941
      %1943 = vrot.lane.b32.xlu0 %v318, 96
      %v1944 = vpop.permute.xlu0 %1943
      %1945 = vrot.lane.b32.xlu0 %v319, 96
      %v1946 = vpop.permute.xlu0 %1945
      %1947 = vrot.lane.b32.xlu0 %v320, 96
      %v1948 = vpop.permute.xlu0 %1947
      %1949 = vrot.lane.b32.xlu0 %v321, 96
      %v1950 = vpop.permute.xlu0 %1949
      %1951 = vrot.lane.b32.xlu0 %v322, 96
      %v1952 = vpop.permute.xlu0 %1951
      %1953 = vrot.lane.b32.xlu0 %v323, 96
      %v1954 = vpop.permute.xlu0 %1953
      %1955 = vrot.lane.b32.xlu0 %v324, 96
      %v1956 = vpop.permute.xlu0 %1955
      %1957 = vrot.lane.b32.xlu0 %v325, 96
      %v1958 = vpop.permute.xlu0 %1957
      %v1975 = vsel %vm357, %v310, %v1832
      %v1976 = vsel %vm357, %v311, %v1834
      %v1977 = vsel %vm357, %v312, %v1836
      %v1978 = vsel %vm357, %v313, %v1838
      %v1979 = vsel %vm357, %v314, %v1840
      %v1980 = vsel %vm357, %v315, %v1842
      %v1981 = vsel %vm357, %v316, %v1844
      %v1982 = vsel %vm357, %v317, %v1846
      %v1983 = vsel %vm357, %v318, %v1848
      %v1984 = vsel %vm357, %v319, %v1850
      %v1985 = vsel %vm357, %v320, %v1852
      %v1986 = vsel %vm357, %v321, %v1854
      %v1987 = vsel %vm357, %v322, %v1856
      %v1988 = vsel %vm357, %v323, %v1858
      %v1989 = vsel %vm357, %v324, %v1860
      %v1990 = vsel %vm357, %v325, %v1862
      %v1991 = vsel %vm542, %v1975, %v1880
      %v1992 = vsel %vm542, %v1976, %v1882
      %v1993 = vsel %vm542, %v1977, %v1884
      %v1994 = vsel %vm542, %v1978, %v1886
      %v1995 = vsel %vm542, %v1979, %v1888
      %v1996 = vsel %vm542, %v1980, %v1890
      %v1997 = vsel %vm542, %v1981, %v1892
      %v1998 = vsel %vm542, %v1982, %v1894
      %v1999 = vsel %vm542, %v1983, %v1896
      %v2000 = vsel %vm542, %v1984, %v1898
      %v2001 = vsel %vm542, %v1985, %v1900
      %v2002 = vsel %vm542, %v1986, %v1902
      %v2003 = vsel %vm542, %v1987, %v1904
      %v2004 = vsel %vm542, %v1988, %v1906
      %v2005 = vsel %vm542, %v1989, %v1908
      %v2006 = vsel %vm542, %v1990, %v1910
      %vm2007 = vcmask 785408
      %v2008 = vsel %vm2007, %v1991, %v1928
      %v2009 = vsel %vm2007, %v1992, %v1930
      %v2010 = vsel %vm2007, %v1993, %v1932
      %v2011 = vsel %vm2007, %v1994, %v1934
      %v2012 = vsel %vm2007, %v1995, %v1936
      %v2013 = vsel %vm2007, %v1996, %v1938
      %v2014 = vsel %vm2007, %v1997, %v1940
      %v2015 = vsel %vm2007, %v1998, %v1942
      %v2016 = vsel %vm2007, %v1999, %v1944
      %v2017 = vsel %vm2007, %v2000, %v1946
      %v2018 = vsel %vm2007, %v2001, %v1948
      %v2019 = vsel %vm2007, %v2002, %v1950
      %v2020 = vsel %vm2007, %v2003, %v1952
      %v2021 = vsel %vm2007, %v2004, %v1954
      %v2022 = vsel %vm2007, %v2005, %v1956
      %v2023 = vsel %vm2007, %v2006, %v1958
      %v2024 = vmul.f32 %v1737, %v2008
      %v2025 = vmul.f32 %v1739, %v2008
      %v2026 = vmul.f32 %v1741, %v2009
      %v2027 = vmul.f32 %v1743, %v2009
      %v2028 = vmul.f32 %v1747, %v2010
      %v2029 = vmul.f32 %v1749, %v2010
      %v2030 = vmul.f32 %v1751, %v2011
      %v2031 = vmul.f32 %v1753, %v2011
      %v2032 = vmul.f32 %v1757, %v2012
      %v2033 = vmul.f32 %v1759, %v2012
      %v2034 = vmul.f32 %v1761, %v2013
      %v2035 = vmul.f32 %v1763, %v2013
      %v2036 = vmul.f32 %v1767, %v2014
      %v2037 = vmul.f32 %v1769, %v2014
      %v2038 = vmul.f32 %v1771, %v2015
      %v2039 = vmul.f32 %v1773, %v2015
      %v2040 = vmul.f32 %v1777, %v2016
      %v2041 = vmul.f32 %v1779, %v2016
      %v2042 = vmul.f32 %v1781, %v2017
      %v2043 = vmul.f32 %v1783, %v2017
      %v2044 = vmul.f32 %v1787, %v2018
      %v2045 = vmul.f32 %v1789, %v2018
      %v2046 = vmul.f32 %v1791, %v2019
      %v2047 = vmul.f32 %v1793, %v2019
      %v2048 = vmul.f32 %v1797, %v2020
      %v2049 = vmul.f32 %v1799, %v2020
      %v2050 = vmul.f32 %v1801, %v2021
      %v2051 = vmul.f32 %v1803, %v2021
      %v2052 = vmul.f32 %v1807, %v2022
      %v2053 = vmul.f32 %v1809, %v2022
      %v2054 = vmul.f32 %v1811, %v2023
      %v2055 = vmul.f32 %v1813, %v2023
      %v2056 = vpack.c.bf16 %v2026, %v2024
      %v2057 = vpack.c.bf16 %v2027, %v2025
      %v2058 = vpack.c.bf16 %v2030, %v2028
      %v2059 = vpack.c.bf16 %v2031, %v2029
      %v2060 = vpack.c.bf16 %v2034, %v2032
      %v2061 = vpack.c.bf16 %v2035, %v2033
      %v2062 = vpack.c.bf16 %v2038, %v2036
      %v2063 = vpack.c.bf16 %v2039, %v2037
      %v2064 = vpack.c.bf16 %v2042, %v2040
      %v2065 = vpack.c.bf16 %v2043, %v2041
      %v2066 = vpack.c.bf16 %v2046, %v2044
      %v2067 = vpack.c.bf16 %v2047, %v2045
      %v2068 = vpack.c.bf16 %v2050, %v2048
      %v2069 = vpack.c.bf16 %v2051, %v2049
      %v2070 = vpack.c.bf16 %v2054, %v2052
      %v2071 = vpack.c.bf16 %v2055, %v2053
      %v2072 = vld [vmem:[%s7] sm:$0xf]
      %v2073 = vld [vmem:[%s7 + $0x4] sm:$0xf]
      %v2074 = vld [vmem:[%s7 + $0x8] sm:$0xf]
      %v2075 = vld [vmem:[%s7 + $0xc] sm:$0xf]
      %v2076 = vld [vmem:[%s7 + $0x10] sm:$0xf]
      %v2077 = vld [vmem:[%s7 + $0x14] sm:$0xf]
      %v2078 = vld [vmem:[%s7 + $0x18] sm:$0xf]
      %v2079 = vld [vmem:[%s7 + $0x1c] sm:$0xf]
      %v2080 = vld [vmem:[%s7 + $0x20] sm:$0xf]
      %v2081 = vld [vmem:[%s7 + $0x24] sm:$0xf]
      %v2082 = vld [vmem:[%s7 + $0x28] sm:$0xf]
      %v2083 = vld [vmem:[%s7 + $0x2c] sm:$0xf]
      %v2084 = vld [vmem:[%s7 + $0x30] sm:$0xf]
      %v2085 = vld [vmem:[%s7 + $0x34] sm:$0xf]
      %v2086 = vld [vmem:[%s7 + $0x38] sm:$0xf]
      %v2087 = vld [vmem:[%s7 + $0x3c] sm:$0xf]
      %v2088 = vld [vmem:[%s7 + $0x40] sm:$0xf]
      %v2089 = vld [vmem:[%s7 + $0x44] sm:$0xf]
      %v2090 = vld [vmem:[%s7 + $0x48] sm:$0xf]
      %v2091 = vld [vmem:[%s7 + $0x4c] sm:$0xf]
      %v2092 = vld [vmem:[%s7 + $0x50] sm:$0xf]
      %v2093 = vld [vmem:[%s7 + $0x54] sm:$0xf]
      %v2094 = vld [vmem:[%s7 + $0x58] sm:$0xf]
      %v2095 = vld [vmem:[%s7 + $0x5c] sm:$0xf]
      %v2096 = vld [vmem:[%s7 + $0x60] sm:$0xf]
      %v2097 = vld [vmem:[%s7 + $0x64] sm:$0xf]
      %v2098 = vld [vmem:[%s7 + $0x68] sm:$0xf]
      %v2099 = vld [vmem:[%s7 + $0x6c] sm:$0xf]
      %v2100 = vld [vmem:[%s7 + $0x70] sm:$0xf]
      %v2101 = vld [vmem:[%s7 + $0x74] sm:$0xf]
      %v2102 = vld [vmem:[%s7 + $0x78] sm:$0xf]
      %v2103 = vld [vmem:[%s7 + $0x7c] sm:$0xf]
      %v2136 = vunpack.c.l.b16 %v2072
      %v2137 = vunpack.c.l.b16 %v2073
      %v2138 = vunpack.c.l.b16 %v2074
      %v2139 = vunpack.c.l.b16 %v2075
      %v2140 = vunpack.c.l.b16 %v2076
      %v2141 = vunpack.c.l.b16 %v2077
      %v2142 = vunpack.c.l.b16 %v2078
      %v2143 = vunpack.c.l.b16 %v2079
      %v2144 = vunpack.c.l.b16 %v2080
      %v2145 = vunpack.c.l.b16 %v2081
      %v2146 = vunpack.c.l.b16 %v2082
      %v2147 = vunpack.c.l.b16 %v2083
      %v2148 = vunpack.c.l.b16 %v2084
      %v2149 = vunpack.c.l.b16 %v2085
      %v2150 = vunpack.c.l.b16 %v2086
      %v2151 = vunpack.c.l.b16 %v2087
      %v2152 = vunpack.c.l.b16 %v2088
      %v2153 = vunpack.c.l.b16 %v2089
      %v2154 = vunpack.c.l.b16 %v2090
      %v2155 = vunpack.c.l.b16 %v2091
      %v2156 = vunpack.c.l.b16 %v2092
      %v2157 = vunpack.c.l.b16 %v2093
      %v2158 = vunpack.c.l.b16 %v2094
      %v2159 = vunpack.c.l.b16 %v2095
      %v2160 = vunpack.c.l.b16 %v2096
      %v2161 = vunpack.c.l.b16 %v2097
      %v2162 = vunpack.c.l.b16 %v2098
      %v2163 = vunpack.c.l.b16 %v2099
      %v2164 = vunpack.c.l.b16 %v2100
      %v2165 = vunpack.c.l.b16 %v2101
      %v2166 = vunpack.c.l.b16 %v2102
      %v2167 = vunpack.c.l.b16 %v2103
      %v2168 = vpack.c.b16 %v2137, %v2136
      %v2169 = vpack.c.b16 %v2139, %v2138
      %v2170 = vpack.c.b16 %v2141, %v2140
      %v2171 = vpack.c.b16 %v2143, %v2142
      %v2172 = vpack.c.b16 %v2145, %v2144
      %v2173 = vpack.c.b16 %v2147, %v2146
      %v2174 = vpack.c.b16 %v2149, %v2148
      %v2175 = vpack.c.b16 %v2151, %v2150
      %v2176 = vpack.c.b16 %v2153, %v2152
      %v2177 = vpack.c.b16 %v2155, %v2154
      %v2178 = vpack.c.b16 %v2157, %v2156
      %v2179 = vpack.c.b16 %v2159, %v2158
      %v2180 = vpack.c.b16 %v2161, %v2160
      %v2181 = vpack.c.b16 %v2163, %v2162
      %v2182 = vpack.c.b16 %v2165, %v2164
      %v2183 = vpack.c.b16 %v2167, %v2166
      %2200 = vmatprep.subr.bf16.mxu0 0
      %2201 = vmatpush1.bf16.msra.mxu0 %v2168
      %2202 = vmatprep.subr.bf16.mxu0 0
      %2203 = vmatpush1.bf16.msra.mxu0 %v2169
      %2204 = vmatprep.subr.bf16.mxu0 0
      %2205 = vmatpush1.bf16.msra.mxu0 %v2170
      %2206 = vmatprep.subr.bf16.mxu0 0
      %2207 = vmatpush1.bf16.msra.mxu0 %v2171
      %2208 = vmatprep.subr.bf16.mxu0 0
      %2209 = vmatpush1.bf16.msra.mxu0 %v2172
      %2210 = vmatprep.subr.bf16.mxu0 0
      %2211 = vmatpush1.bf16.msra.mxu0 %v2173
      %2212 = vmatprep.subr.bf16.mxu0 0
      %2213 = vmatpush1.bf16.msra.mxu0 %v2174
      %2214 = vmatprep.subr.bf16.mxu0 0
      %2215 = vmatpush1.bf16.msra.mxu0 %v2175
      %2216 = vmatprep.subr.bf16.mxu0 0
      %2217 = vmatpush1.bf16.msra.mxu0 %v2176
      %2218 = vmatprep.subr.bf16.mxu0 0
      %2219 = vmatpush1.bf16.msra.mxu0 %v2177
      %2220 = vmatprep.subr.bf16.mxu0 0
      %2221 = vmatpush1.bf16.msra.mxu0 %v2178
      %2222 = vmatprep.subr.bf16.mxu0 0
      %2223 = vmatpush1.bf16.msra.mxu0 %v2179
      %2224 = vmatprep.subr.bf16.mxu0 0
      %2225 = vmatpush1.bf16.msra.mxu0 %v2180
      %2226 = vmatprep.subr.bf16.mxu0 0
      %2227 = vmatpush1.bf16.msra.mxu0 %v2181
      %2228 = vmatprep.subr.bf16.mxu0 0
      %2229 = vmatpush1.bf16.msra.mxu0 %v2182
      %2230 = vmatprep.subr.bf16.mxu0 0
      %2231 = vmatpush1.bf16.msra.mxu0 %v2183
      %2232 = vmatprep.mubr.bf16.mxu0 %v2057
      %2233 = vmatmul.mubr.bf16.gmra.mrb[0].mxu0 %v2056
      %v2234 = vpop.f32.mrb[0].mxu0
      %v2235 = vadd.f32 0.0, %v2234
      %v2236 = vpop.f32.mrb[0].mxu0
      %v2237 = vpop.f32.mrb[0].mxu0
      %v2238 = vadd.f32 0.0, %v2237
      %v2239 = vpop.f32.mrb[0].mxu0
      %2240 = vmatprep.mubr.bf16.mxu0 %v2059
      %2241 = vmatmul.mubr.bf16.gmra.mrb[0].mxu0 %v2058
      %v2242 = vpop.f32.mrb[0].mxu0
      %v2243 = vadd.f32 0.0, %v2242
      %v2244 = vpop.f32.mrb[0].mxu0
      %v2245 = vpop.f32.mrb[0].mxu0
      %v2246 = vadd.f32 0.0, %v2245
      %v2247 = vpop.f32.mrb[0].mxu0
      %2248 = vmatprep.mubr.bf16.mxu0 %v2061
      %2249 = vmatmul.mubr.bf16.gmra.mrb[0].mxu0 %v2060
      %v2250 = vpop.f32.mrb[0].mxu0
      %v2251 = vadd.f32 0.0, %v2250
      %v2252 = vpop.f32.mrb[0].mxu0
      %v2253 = vpop.f32.mrb[0].mxu0
      %v2254 = vadd.f32 0.0, %v2253
      %v2255 = vpop.f32.mrb[0].mxu0
      %2256 = vmatprep.mubr.bf16.mxu0 %v2063
      %2257 = vmatmul.mubr.bf16.gmra.mrb[0].mxu0 %v2062
      %v2258 = vpop.f32.mrb[0].mxu0
      %v2259 = vadd.f32 0.0, %v2258
      %v2260 = vpop.f32.mrb[0].mxu0
      %v2261 = vpop.f32.mrb[0].mxu0
      %v2262 = vadd.f32 0.0, %v2261
      %v2263 = vpop.f32.mrb[0].mxu0
      %2264 = vmatprep.mubr.bf16.mxu0 %v2065
      %2265 = vmatmul.mubr.bf16.gmra.mrb[0].mxu0 %v2064
      %v2266 = vpop.f32.mrb[0].mxu0
      %v2267 = vadd.f32 0.0, %v2266
      %v2268 = vpop.f32.mrb[0].mxu0
      %v2269 = vpop.f32.mrb[0].mxu0
      %v2270 = vadd.f32 0.0, %v2269
      %v2271 = vpop.f32.mrb[0].mxu0
      %2272 = vmatprep.mubr.bf16.mxu0 %v2067
      %2273 = vmatmul.mubr.bf16.gmra.mrb[0].mxu0 %v2066
      %v2274 = vpop.f32.mrb[0].mxu0
      %v2275 = vadd.f32 0.0, %v2274
      %v2276 = vpop.f32.mrb[0].mxu0
      %v2277 = vpop.f32.mrb[0].mxu0
      %v2278 = vadd.f32 0.0, %v2277
      %v2279 = vpop.f32.mrb[0].mxu0
      %2280 = vmatprep.mubr.bf16.mxu0 %v2069
      %2281 = vmatmul.mubr.bf16.gmra.mrb[0].mxu0 %v2068
      %v2282 = vpop.f32.mrb[0].mxu0
      %v2283 = vadd.f32 0.0, %v2282
      %v2284 = vpop.f32.mrb[0].mxu0
      %v2285 = vpop.f32.mrb[0].mxu0
      %v2286 = vadd.f32 0.0, %v2285
      %v2287 = vpop.f32.mrb[0].mxu0
      %2288 = vmatprep.mubr.bf16.mxu0 %v2071
      %2289 = vmatmul.mubr.bf16.gmra.mrb[0].mxu0 %v2070
      %v2290 = vpop.f32.mrb[0].mxu0
      %v2291 = vadd.f32 0.0, %v2290
      %v2292 = vpop.f32.mrb[0].mxu0
      %v2293 = vpop.f32.mrb[0].mxu0
      %v2294 = vadd.f32 0.0, %v2293
      %v2295 = vpop.f32.mrb[0].mxu0
      %2296 = vdwg.mxu0
      %2297 = vst [vmem:[%s307] sm:$0xff] %v2235
      %2298 = vst [vmem:[%s307 + $0x8] sm:$0xff] %v2238
      %2299 = vst [vmem:[%s307 + $0x10] sm:$0xff] %v2243
      %2300 = vst [vmem:[%s307 + $0x18] sm:$0xff] %v2246
      %2301 = vst [vmem:[%s307 + $0x20] sm:$0xff] %v2251
      %2302 = vst [vmem:[%s307 + $0x28] sm:$0xff] %v2254
      %2303 = vst [vmem:[%s307 + $0x30] sm:$0xff] %v2259
      %2304 = vst [vmem:[%s307 + $0x38] sm:$0xff] %v2262
      %2305 = vst [vmem:[%s307 + $0x40] sm:$0xff] %v2267
      %2306 = vst [vmem:[%s307 + $0x48] sm:$0xff] %v2270
      %2307 = vst [vmem:[%s307 + $0x50] sm:$0xff] %v2275
      %2308 = vst [vmem:[%s307 + $0x58] sm:$0xff] %v2278
      %2309 = vst [vmem:[%s307 + $0x60] sm:$0xff] %v2283
      %2310 = vst [vmem:[%s307 + $0x68] sm:$0xff] %v2286
      %2311 = vst [vmem:[%s307 + $0x70] sm:$0xff] %v2291
      %2312 = vst [vmem:[%s307 + $0x78] sm:$0xff] %v2294
      %s2313 = smul.u32 16, %s19
      %p2314 = scmp.lt.s32.totalorder %s2313, 31
      %s2315 = scalar_select %p2314, %s2313, 31
      %s2316 = smul.addr %s2315, 8
      %s2317 = scalar_lea.vmem %s8, %s2316
      // Predicated region
      $region53: #{fast_esheaf_forward.1} parent=51 // pred_check
        %p2318 = pneg %p210
      $region54: #{fast_esheaf_forward.1} parent=51 // pred_check_branch
        %2320 = sbr.rel (%p2318) target = $region56
      $region55: #{fast_esheaf_forward.1} parent=51 // pred_region
        %s2321 = smul.u32 16, %s19
      $region56: #{fast_esheaf_forward.1} parent=51 // pred_fallthru
        _
    $region52: #{fast_esheaf_forward.1} parent=5 // pred_fallthru
      _
    %p2322 = scmp.le.s32.totalorder 2, %s14
    // Predicated region
    $region57: #{fast_esheaf_forward.1} parent=5 // pred_check
      %p2323 = pneg %p2322
    $region58: #{fast_esheaf_forward.1} parent=5 // pred_check_branch
      %2325 = sbr.rel (%p2323) target = $region60
    $region59: #{fast_esheaf_forward.1} parent=5 // pred_region
      %s2326 = ssub.s32 %s14, 2
      // Predicated region
      $region61: #{fast_esheaf_forward.1} parent=59 // pred_check
        %p2327 = pneg %p216
      $region62: #{fast_esheaf_forward.1} parent=59 // pred_check_branch
        %2329 = sbr.rel (%p2327) target = $region64
      $region63: #{fast_esheaf_forward.1} parent=59 // pred_region
        %s2330 = smul.u32 16, %s20
        %p2331 = scmp.lt.s32.totalorder %s2330, 31
        %s2332 = scalar_select %p2331, %s2330, 31
        %s2333 = smul.addr %s2332, 8
        %s2334 = scalar_lea.vmem %s8, %s2333
      $region64: #{fast_esheaf_forward.1} parent=59 // pred_fallthru
        _
    $region60: #{fast_esheaf_forward.1} parent=5 // pred_fallthru
      _
  $region6: #{fast_esheaf_forward.1} parent=0 // loop_footer
    %s18 = sadd.s32 1, %s14
  $region7: #{fast_esheaf_forward.1} parent=0 // loop_footer_branch
    %13 = sbr.rel target = $region3
  $region8: #{fast_esheaf_forward.1} parent=0 // loop_exit
    _

</llo_original>
